<compile_context>
chip_gen: v7x
topology: tpu7x:2x2x1
jax: 0.10.0
libtpu: 0.0.40
codegen_flags: <defaults>
</compile_context>

<pallas_src>
import functools

import jax
import jax.numpy as jnp
import numpy as np
from jax.experimental import pallas as pl
from jax.experimental.pallas import tpu as pltpu


# ----------------------------------------------------------------------------
# Kernel 1: multi-layer GRU, single timestep.  grid=(L,) streams one layer's
# weights per grid step; the layer input is carried in VMEM scratch.
# ----------------------------------------------------------------------------
def gru_stack_kernel(x_ref, h0_ref, wih_ref, whh_ref, bih_ref, bhh_ref,
                     hout_ref, feat_ref, xbuf_ref, *, hidden):
    H = hidden
    layer = pl.program_id(0)

    @pl.when(layer == 0)
    def _():
        xbuf_ref[...] = x_ref[...]                    # embedded token (B, E) bf16

    x = xbuf_ref[...]                                 # (B, H) bf16
    h_prev = h0_ref[0]                                # (B, H) f32

    # bf16 MXU matmuls with f32 accumulation; gate math in f32.
    gi = jnp.dot(x, wih_ref[0], preferred_element_type=jnp.float32) + bih_ref[0]
    gh = jnp.dot(h_prev.astype(jnp.bfloat16), whh_ref[0],
                 preferred_element_type=jnp.float32) + bhh_ref[0]

    # PyTorch GRU gate order: r, z, n.  H is a multiple of 128, so every gate
    # slice is a lane-aligned zero-cost view (no XLU relayout).
    r = jax.nn.sigmoid(gi[:, 0:H] + gh[:, 0:H])
    z = jax.nn.sigmoid(gi[:, H:2 * H] + gh[:, H:2 * H])
    n = jnp.tanh(gi[:, 2 * H:3 * H] + r * gh[:, 2 * H:3 * H])
    h_new = (1.0 - z) * n + z * h_prev                # (B, H) f32

    hout_ref[0] = h_new                               # new hidden for this layer
    xbuf_ref[...] = h_new.astype(xbuf_ref.dtype)      # feed next layer

    @pl.when(layer == pl.num_programs(0) - 1)
    def _():
        feat_ref[...] = h_new.astype(feat_ref.dtype)  # classifier input, bf16


# ----------------------------------------------------------------------------
# Kernel 2: vocab-tiled Linear + LogSoftmax with online max / sum-exp.
# The (B, V) output block index is constant over the grid, so the whole logits
# slab stays VMEM-resident and is normalized in place on the last vocab tile.
# ----------------------------------------------------------------------------
def classifier_kernel(feat_ref, w_ref, b_ref, logp_ref, m_ref, l_ref, *, tv):
    j = pl.program_id(0)

    @pl.when(j == 0)
    def _():
        m_ref[...] = jnp.full_like(m_ref, -jnp.inf)
        l_ref[...] = jnp.zeros_like(l_ref)

    logits = jnp.dot(feat_ref[...], w_ref[...],
                     preferred_element_type=jnp.float32) + b_ref[...]   # (B, TV)

    m_prev = m_ref[...]
    m_new = jnp.maximum(m_prev, jnp.max(logits, axis=-1, keepdims=True))
    l_ref[...] = (l_ref[...] * jnp.exp(m_prev - m_new)
                  + jnp.sum(jnp.exp(logits - m_new), axis=-1, keepdims=True))
    m_ref[...] = m_new

    start = pl.multiple_of(j * tv, tv)
    logp_ref[:, pl.ds(start, tv)] = logits            # lane-aligned slice store

    @pl.when(j == pl.num_programs(0) - 1)
    def _():
        # NOTE: V is required to be a multiple of tv; a ragged tail would need
        # explicit -inf / 0 masking of the padded lanes in max / sumexp above.
        lse = m_ref[...] + jnp.log(l_ref[...])
        logp_ref[...] = logp_ref[...] - lse


# ----------------------------------------------------------------------------
# Wrapper: embedding gather + two pallas_calls (GRU stack, classifier).
# ----------------------------------------------------------------------------
def decoder_forward(tokens, h0, params, *, vocab_tile=128):
    emb, wih_t, whh_t, bih, bhh, wlin_t, blin = params
    L, E, H3 = wih_t.shape
    H = H3 // 3
    V = wlin_t.shape[1]
    B = tokens.shape[0]
    assert V % vocab_tile == 0, "pad the vocab to a multiple of the vocab tile"
    n_vt = V // vocab_tile

    # Embedding lookup (single XLA gather).
    # TODO(synk): fuse via scalar-prefetched token ids + pl.Element BlockSpec.
    x = jnp.take(emb, tokens, axis=0)                 # (B, E) bf16

    gru_cost = pl.CostEstimate(
        flops=2 * B * (E + H) * 3 * H * L,
        transcendentals=3 * B * H * L,
        bytes_accessed=(2 * L * (E + H) * 3 * H        # bf16 GRU weights
                        + 4 * L * 2 * 3 * H            # biases (f32)
                        + 2 * B * E                    # embedded input
                        + 4 * L * B * H * 2            # h0 + h_out
                        + 2 * B * H))                  # feat output

    h_out, feat = pl.pallas_call(
        functools.partial(gru_stack_kernel, hidden=H),
        grid=(L,),
        in_specs=[
            pl.BlockSpec((B, E), lambda l: (0, 0)),              # embedded token
            pl.BlockSpec((1, B, H), lambda l: (l, 0, 0)),        # h0[l]
            pl.BlockSpec((1, E, 3 * H), lambda l: (l, 0, 0)),    # W_ih[l]
            pl.BlockSpec((1, H, 3 * H), lambda l: (l, 0, 0)),    # W_hh[l]
            pl.BlockSpec((1, 1, 3 * H), lambda l: (l, 0, 0)),    # b_ih[l]
            pl.BlockSpec((1, 1, 3 * H), lambda l: (l, 0, 0)),    # b_hh[l]
        ],
        out_specs=(
            pl.BlockSpec((1, B, H), lambda l: (l, 0, 0)),        # new hidden
            pl.BlockSpec((B, H), lambda l: (0, 0)),              # last-layer feat
        ),
        out_shape=(jax.ShapeDtypeStruct((L, B, H), jnp.float32),
                   jax.ShapeDtypeStruct((B, H), jnp.bfloat16)),
        scratch_shapes=[pltpu.VMEM((B, H), jnp.bfloat16)],       # layer-input carry
        compiler_params=pltpu.CompilerParams(
            dimension_semantics=("arbitrary",)),                 # layers are sequential
        cost_estimate=gru_cost,
    )(x, h0, wih_t, whh_t, bih, bhh)

    cls_cost = pl.CostEstimate(
        flops=2 * B * H * V,
        transcendentals=B * V + B,
        bytes_accessed=2 * H * V + 4 * V + 2 * B * H + 4 * B * V)

    # NOTE: at realistic vocab sizes on v5e/v6e, raise vmem_limit_bytes and use
    # wider vocab tiles; on v7x keep tiles small (64 MiB physical VMEM) and
    # split the vocab axis across the 2 TensorCores (see TODO above).
    logp = pl.pallas_call(
        functools.partial(classifier_kernel, tv=vocab_tile),
        grid=(n_vt,),
        in_specs=[
            pl.BlockSpec((B, H), lambda j: (0, 0)),              # features
            pl.BlockSpec((H, vocab_tile), lambda j: (0, j)),     # W_lin tile
            pl.BlockSpec((1, vocab_tile), lambda j: (0, j)),     # bias tile
        ],
        out_specs=pl.BlockSpec((B, V), lambda j: (0, 0)),        # VMEM-resident
        out_shape=jax.ShapeDtypeStruct((B, V), jnp.float32),
        scratch_shapes=[pltpu.VMEM((B, 1), jnp.float32),         # running max
                        pltpu.VMEM((B, 1), jnp.float32)],        # running sumexp
        compiler_params=pltpu.CompilerParams(
            dimension_semantics=("arbitrary",)),
        cost_estimate=cls_cost,
    )(feat, wlin_t, blin)

    return logp, h_out


# ----------------------------------------------------------------------------
# Parameter construction (shapes match the PyTorch module; init_weights sets
# biases to 0; embedding / linear weights uniform(-0.05, 0.05)).
# ----------------------------------------------------------------------------
def make_params(key, vocab, embed_dim, hidden, nlayers, pad_idx):
    assert embed_dim == hidden, "stacked layer weights assume embed_dim == hidden"
    ks = jax.random.split(key, 4)
    emb = jax.random.uniform(ks[0], (vocab, embed_dim), jnp.float32, -0.05, 0.05)
    emb = emb.at[pad_idx].set(0.0)                    # nn.Embedding padding_idx row
    wih = jax.random.normal(ks[1], (nlayers, 3 * hidden, embed_dim), jnp.float32) * 0.1
    whh = jax.random.normal(ks[2], (nlayers, 3 * hidden, hidden), jnp.float32) * 0.1
    bih = jnp.zeros((nlayers, 1, 3 * hidden), jnp.float32)   # init_weights: biases = 0
    bhh = jnp.zeros((nlayers, 1, 3 * hidden), jnp.float32)
    wlin = jax.random.uniform(ks[3], (vocab, hidden), jnp.float32, -0.05, 0.05)
    blin = jnp.zeros((1, vocab), jnp.float32)
    # Pre-transpose to x @ W layout; bf16 weights halve HBM->VMEM bytes and hit
    # the native bf16 MXU path (f32 accumulation is forced in the kernels).
    wih_t = jnp.transpose(wih, (0, 2, 1)).astype(jnp.bfloat16)   # (L, E, 3H)
    whh_t = jnp.transpose(whh, (0, 2, 1)).astype(jnp.bfloat16)   # (L, H, 3H)
    wlin_t = jnp.transpose(wlin, (1, 0)).astype(jnp.bfloat16)    # (H, V)
    return (emb.astype(jnp.bfloat16), wih_t, whh_t, bih, bhh, wlin_t, blin)


def reference_forward(tokens, h0, params):
    """Pure-JAX reference mirroring the PyTorch forward (bf16 matmul inputs,
    f32 accumulation, identical to the kernel's numerics)."""
    emb, wih_t, whh_t, bih, bhh, wlin_t, blin = params
    L, _, H3 = wih_t.shape
    H = H3 // 3
    x = jnp.take(emb, tokens, axis=0)
    h_out = []
    for layer in range(L):
        h_prev = h0[layer]
        gi = jnp.dot(x, wih_t[layer], preferred_element_type=jnp.float32) + bih[layer]
        gh = jnp.dot(h_prev.astype(jnp.bfloat16), whh_t[layer],
                     preferred_element_type=jnp.float32) + bhh[layer]
        r = jax.nn.sigmoid(gi[:, :H] + gh[:, :H])
        z = jax.nn.sigmoid(gi[:, H:2 * H] + gh[:, H:2 * H])
        n = jnp.tanh(gi[:, 2 * H:] + r * gh[:, 2 * H:])
        h_new = (1.0 - z) * n + z * h_prev
        h_out.append(h_new)
        x = h_new.astype(jnp.bfloat16)
    logits = jnp.dot(x, wlin_t, preferred_element_type=jnp.float32) + blin
    logp = jax.nn.log_softmax(logits, axis=-1)
    return logp, jnp.stack(h_out, axis=0)


if __name__ == "__main__":
    VOCAB = 512      # input_size; multiple of the 128-wide vocab tile
    HIDDEN = 128     # hidden_size; multiple of 128 -> lane-aligned gate slices
    EMBED = 128      # embed_dim (== hidden so stacked layer weights share shape)
    NLAYERS = 2
    BATCH = 8        # full (8, 128) f32 vreg rows
    PAD_IDX = 0

    key = jax.random.PRNGKey(0)
    k_par, k_tok = jax.random.split(key)
    params = make_params(k_par, VOCAB, EMBED, HIDDEN, NLAYERS, PAD_IDX)

    tokens = jax.random.randint(k_tok, (BATCH,), 0, VOCAB, dtype=jnp.int32)
    h0 = jnp.zeros((NLAYERS, BATCH, HIDDEN), jnp.float32)   # init_hidden()

    logp, h_out = jax.jit(decoder_forward)(tokens, h0, params)
    jax.block_until_ready((logp, h_out))

    ref_logp, ref_h = reference_forward(tokens, h0, params)
    np.testing.assert_allclose(np.asarray(logp), np.asarray(ref_logp),
                               rtol=1e-2, atol=1e-2)
    np.testing.assert_allclose(np.asarray(h_out), np.asarray(ref_h),
                               rtol=1e-2, atol=1e-2)

    print("KERNEL_OK")
</pallas_src>

<mosaic_0001>
module attributes {stable_mosaic.version = 11 : i64} {
  func.func @classifier_kernel(%arg0: i32, %arg1: memref<8x128xbf16, #tpu.memory_space<vmem>>, %arg2: memref<128x128xbf16, #tpu.memory_space<vmem>>, %arg3: memref<1x128xf32, #tpu.memory_space<vmem>>, %arg4: memref<8x512xf32, #tpu.memory_space<vmem>>, %arg5: memref<8x1xf32, #tpu.memory_space<vmem>>, %arg6: memref<8x1xf32, #tpu.memory_space<vmem>>) attributes {dimension_semantics = [#tpu.dimension_semantics<arbitrary>], iteration_bounds = array<i64: 4>, scalar_prefetch = 0 : i64, scratch_operands = 2 : i64, tpu.core_type = #tpu.core_type<tc>, window_params = [{pipeline_mode = #tpu.pipeline_mode<synchronous>, transform_indices = @transform_0, window_bounds = array<i64: 8, 128>}, {transform_indices = @transform_1, window_bounds = array<i64: 128, 128>}, {transform_indices = @transform_2, window_bounds = array<i64: 1, 128>}, {pipeline_mode = #tpu.pipeline_mode<synchronous>, transform_indices = @transform_3, window_bounds = array<i64: 8, 512>}]} {
    %c0_i32 = arith.constant 0 : i32
    %0 = arith.cmpi eq, %arg0, %c0_i32 : i32
    %1 = arith.extui %0 : i1 to i32
    %c0_i32_0 = arith.constant 0 : i32
    %2 = arith.cmpi ne, %1, %c0_i32_0 : i32
    scf.if %2 {
      %cst_18 = arith.constant 0xFF800000 : f32
      %32 = vector.broadcast %cst_18 : f32 to vector<8x1xf32>
      %c0_19 = arith.constant 0 : index
      %c0_20 = arith.constant 0 : index
      %33 = vector.load %arg5[%c0_19, %c0_20] : memref<8x1xf32, #tpu.memory_space<vmem>>, vector<8x1xf32>
      tpu.vector_store %arg5[%c0_19, %c0_20], %32 {strides = array<i32>} : memref<8x1xf32, #tpu.memory_space<vmem>>, vector<8x1xf32>,
      %cst_21 = arith.constant 0.000000e+00 : f32
      %34 = vector.broadcast %cst_21 : f32 to vector<8x1xf32>
      %c0_22 = arith.constant 0 : index
      %c0_23 = arith.constant 0 : index
      %35 = vector.load %arg6[%c0_22, %c0_23] : memref<8x1xf32, #tpu.memory_space<vmem>>, vector<8x1xf32>
      tpu.vector_store %arg6[%c0_22, %c0_23], %34 {strides = array<i32>} : memref<8x1xf32, #tpu.memory_space<vmem>>, vector<8x1xf32>,
    } else {
    }
    %c0 = arith.constant 0 : index
    %c0_1 = arith.constant 0 : index
    %3 = vector.load %arg1[%c0, %c0_1] : memref<8x128xbf16, #tpu.memory_space<vmem>>, vector<8x128xbf16>
    %c0_2 = arith.constant 0 : index
    %c0_3 = arith.constant 0 : index
    %4 = vector.load %arg2[%c0_2, %c0_3] : memref<128x128xbf16, #tpu.memory_space<vmem>>, vector<128x128xbf16>
    %cst = arith.constant dense<0.000000e+00> : vector<8x128xf32>
    %5 = tpu.matmul %3, %4, %cst {dimension_numbers = #tpu.dot_dimension_numbers<[1], [0], [0], [1], [0, 0, 1, 1], [], []>} : vector<8x128xbf16>, vector<128x128xbf16>, vector<8x128xf32> -> vector<8x128xf32>
    %c0_4 = arith.constant 0 : index
    %c0_5 = arith.constant 0 : index
    %6 = vector.load %arg3[%c0_4, %c0_5] : memref<1x128xf32, #tpu.memory_space<vmem>>, vector<1x128xf32>
    %7 = vector.broadcast %6 : vector<1x128xf32> to vector<8x128xf32>
    %8 = arith.addf %5, %7 : vector<8x128xf32>
    %c0_6 = arith.constant 0 : index
    %c0_7 = arith.constant 0 : index
    %9 = vector.load %arg5[%c0_6, %c0_7] : memref<8x1xf32, #tpu.memory_space<vmem>>, vector<8x1xf32>
    %cst_8 = arith.constant dense<0xFF800000> : vector<8xf32>
    %10 = vector.multi_reduction <maximumf>, %8, %cst_8 [1] : vector<8x128xf32> to vector<8xf32>
    %11 = vector.shape_cast %10 : vector<8xf32> to vector<8x1xf32>
    %12 = arith.maximumf %9, %11 : vector<8x1xf32>
    %c0_9 = arith.constant 0 : index
    %c0_10 = arith.constant 0 : index
    %13 = vector.load %arg6[%c0_9, %c0_10] : memref<8x1xf32, #tpu.memory_space<vmem>>, vector<8x1xf32>
    %14 = arith.subf %9, %12 : vector<8x1xf32>
    %15 = math.exp %14 : vector<8x1xf32>
    %16 = arith.mulf %13, %15 : vector<8x1xf32>
    %17 = vector.broadcast %12 : vector<8x1xf32> to vector<8x128xf32>
    %18 = arith.subf %8, %17 : vector<8x128xf32>
    %19 = math.exp %18 : vector<8x128xf32>
    %cst_11 = arith.constant dense<0.000000e+00> : vector<8xf32>
    %20 = vector.multi_reduction <add>, %19, %cst_11 [1] : vector<8x128xf32> to vector<8xf32>
    %21 = vector.shape_cast %20 : vector<8xf32> to vector<8x1xf32>
    %22 = arith.addf %16, %21 : vector<8x1xf32>
    %c0_12 = arith.constant 0 : index
    %c0_13 = arith.constant 0 : index
    %23 = vector.load %arg6[%c0_12, %c0_13] : memref<8x1xf32, #tpu.memory_space<vmem>>, vector<8x1xf32>
    tpu.vector_store %arg6[%c0_12, %c0_13], %22 {strides = array<i32>} : memref<8x1xf32, #tpu.memory_space<vmem>>, vector<8x1xf32>,
    %c0_14 = arith.constant 0 : index
    %c0_15 = arith.constant 0 : index
    %24 = vector.load %arg5[%c0_14, %c0_15] : memref<8x1xf32, #tpu.memory_space<vmem>>, vector<8x1xf32>
    tpu.vector_store %arg5[%c0_14, %c0_15], %12 {strides = array<i32>} : memref<8x1xf32, #tpu.memory_space<vmem>>, vector<8x1xf32>,
    %c128_i32 = arith.constant 128 : i32
    %25 = arith.muli %arg0, %c128_i32 : i32
    %26 = tpu.assume_multiple %25, 128 : i32
    %c0_16 = arith.constant 0 : index
    %27 = arith.index_cast %26 : i32 to index
    %28 = vector.load %arg4[%c0_16, %27] : memref<8x512xf32, #tpu.memory_space<vmem>>, vector<8x128xf32>
    tpu.vector_store %arg4[%c0_16, %27], %8 {strides = array<i32>} : memref<8x512xf32, #tpu.memory_space<vmem>>, vector<8x128xf32>,
    %c3_i32 = arith.constant 3 : i32
    %29 = arith.cmpi eq, %arg0, %c3_i32 : i32
    %30 = arith.extui %29 : i1 to i32
    %c0_i32_17 = arith.constant 0 : i32
    %31 = arith.cmpi ne, %30, %c0_i32_17 : i32
    scf.if %31 {
      %c0_18 = arith.constant 0 : index
      %c0_19 = arith.constant 0 : index
      %32 = vector.load %arg5[%c0_18, %c0_19] : memref<8x1xf32, #tpu.memory_space<vmem>>, vector<8x1xf32>
      %c0_20 = arith.constant 0 : index
      %c0_21 = arith.constant 0 : index
      %33 = vector.load %arg6[%c0_20, %c0_21] : memref<8x1xf32, #tpu.memory_space<vmem>>, vector<8x1xf32>
      %34 = math.log %33 : vector<8x1xf32>
      %35 = arith.addf %32, %34 : vector<8x1xf32>
      %c0_22 = arith.constant 0 : index
      %c0_23 = arith.constant 0 : index
      %36 = vector.load %arg4[%c0_22, %c0_23] : memref<8x512xf32, #tpu.memory_space<vmem>>, vector<8x512xf32>
      %37 = vector.broadcast %35 : vector<8x1xf32> to vector<8x512xf32>
      %38 = arith.subf %36, %37 : vector<8x512xf32>
      %c0_24 = arith.constant 0 : index
      %c0_25 = arith.constant 0 : index
      %39 = vector.load %arg4[%c0_24, %c0_25] : memref<8x512xf32, #tpu.memory_space<vmem>>, vector<8x512xf32>
      tpu.vector_store %arg4[%c0_24, %c0_25], %38 {strides = array<i32>} : memref<8x512xf32, #tpu.memory_space<vmem>>, vector<8x512xf32>,
    } else {
    }
    return
  }
  func.func @transform_0(%arg0: i32) -> (i32, i32) {
    %c0_i32 = arith.constant 0 : i32
    %c0_i32_0 = arith.constant 0 : i32
    %c0_i32_1 = arith.constant 0 : i32
    return %c0_i32, %c0_i32_0 : i32, i32
  }
  func.func @transform_1(%arg0: i32) -> (i32, i32) {
    %c0_i32 = arith.constant 0 : i32
    %c0_i32_0 = arith.constant 0 : i32
    return %c0_i32, %arg0 : i32, i32
  }
  func.func @transform_2(%arg0: i32) -> (i32, i32) {
    %c0_i32 = arith.constant 0 : i32
    %c0_i32_0 = arith.constant 0 : i32
    return %c0_i32, %arg0 : i32, i32
  }
  func.func @transform_3(%arg0: i32) -> (i32, i32) {
    %c0_i32 = arith.constant 0 : i32
    %c0_i32_0 = arith.constant 0 : i32
    %c0_i32_1 = arith.constant 0 : i32
    return %c0_i32, %c0_i32_0 : i32, i32
  }
}

module attributes {stable_mosaic.version = 11 : i64} {
  func.func @gru_stack_kernel(%arg0: i32, %arg1: memref<8x128xbf16, #tpu.memory_space<vmem>>, %arg2: memref<1x8x128xf32, #tpu.memory_space<vmem>>, %arg3: memref<1x128x384xbf16, #tpu.memory_space<vmem>>, %arg4: memref<1x128x384xbf16, #tpu.memory_space<vmem>>, %arg5: memref<1x1x384xf32, #tpu.memory_space<vmem>>, %arg6: memref<1x1x384xf32, #tpu.memory_space<vmem>>, %arg7: memref<1x8x128xf32, #tpu.memory_space<vmem>>, %arg8: memref<8x128xbf16, #tpu.memory_space<vmem>>, %arg9: memref<8x128xbf16, #tpu.memory_space<vmem>>) attributes {dimension_semantics = [#tpu.dimension_semantics<arbitrary>], iteration_bounds = array<i64: 2>, scalar_prefetch = 0 : i64, scratch_operands = 1 : i64, tpu.core_type = #tpu.core_type<tc>, window_params = [{pipeline_mode = #tpu.pipeline_mode<synchronous>, transform_indices = @transform_0, window_bounds = array<i64: 8, 128>}, {transform_indices = @transform_1, window_bounds = array<i64: 1, 8, 128>}, {transform_indices = @transform_2, window_bounds = array<i64: 1, 128, 384>}, {transform_indices = @transform_3, window_bounds = array<i64: 1, 128, 384>}, {transform_indices = @transform_4, window_bounds = array<i64: 1, 1, 384>}, {transform_indices = @transform_5, window_bounds = array<i64: 1, 1, 384>}, {transform_indices = @transform_6, window_bounds = array<i64: 1, 8, 128>}, {pipeline_mode = #tpu.pipeline_mode<synchronous>, transform_indices = @transform_7, window_bounds = array<i64: 8, 128>}]} {
    %c0_i32 = arith.constant 0 : i32
    %0 = arith.cmpi eq, %arg0, %c0_i32 : i32
    %1 = arith.extui %0 : i1 to i32
    %c0_i32_0 = arith.constant 0 : i32
    %2 = arith.cmpi ne, %1, %c0_i32_0 : i32
    scf.if %2 {
      %c0_27 = arith.constant 0 : index
      %c0_28 = arith.constant 0 : index
      %55 = vector.load %arg1[%c0_27, %c0_28] : memref<8x128xbf16, #tpu.memory_space<vmem>>, vector<8x128xbf16>
      %c0_29 = arith.constant 0 : index
      %c0_30 = arith.constant 0 : index
      %56 = vector.load %arg9[%c0_29, %c0_30] : memref<8x128xbf16, #tpu.memory_space<vmem>>, vector<8x128xbf16>
      tpu.vector_store %arg9[%c0_29, %c0_30], %55 {strides = array<i32>} : memref<8x128xbf16, #tpu.memory_space<vmem>>, vector<8x128xbf16>,
    } else {
    }
    %c0 = arith.constant 0 : index
    %c0_1 = arith.constant 0 : index
    %3 = vector.load %arg9[%c0, %c0_1] : memref<8x128xbf16, #tpu.memory_space<vmem>>, vector<8x128xbf16>
    %c0_2 = arith.constant 0 : index
    %c0_3 = arith.constant 0 : index
    %c0_4 = arith.constant 0 : index
    %4 = vector.load %arg2[%c0_2, %c0_3, %c0_4] : memref<1x8x128xf32, #tpu.memory_space<vmem>>, vector<1x8x128xf32>
    %5 = vector.shape_cast %4 : vector<1x8x128xf32> to vector<8x128xf32>
    %c0_5 = arith.constant 0 : index
    %c0_6 = arith.constant 0 : index
    %c0_7 = arith.constant 0 : index
    %6 = vector.load %arg3[%c0_5, %c0_6, %c0_7] : memref<1x128x384xbf16, #tpu.memory_space<vmem>>, vector<1x128x384xbf16>
    %7 = vector.shape_cast %6 : vector<1x128x384xbf16> to vector<128x384xbf16>
    %cst = arith.constant dense<0.000000e+00> : vector<8x384xf32>
    %8 = tpu.matmul %3, %7, %cst {dimension_numbers = #tpu.dot_dimension_numbers<[1], [0], [0], [1], [0, 0, 1, 1], [], []>} : vector<8x128xbf16>, vector<128x384xbf16>, vector<8x384xf32> -> vector<8x384xf32>
    %c0_8 = arith.constant 0 : index
    %c0_9 = arith.constant 0 : index
    %c0_10 = arith.constant 0 : index
    %9 = vector.load %arg5[%c0_8, %c0_9, %c0_10] : memref<1x1x384xf32, #tpu.memory_space<vmem>>, vector<1x1x384xf32>
    %10 = vector.shape_cast %9 : vector<1x1x384xf32> to vector<1x384xf32>
    %11 = vector.broadcast %10 : vector<1x384xf32> to vector<8x384xf32>
    %12 = arith.addf %8, %11 : vector<8x384xf32>
    %13 = arith.truncf %5 : vector<8x128xf32> to vector<8x128xbf16>
    %c0_11 = arith.constant 0 : index
    %c0_12 = arith.constant 0 : index
    %c0_13 = arith.constant 0 : index
    %14 = vector.load %arg4[%c0_11, %c0_12, %c0_13] : memref<1x128x384xbf16, #tpu.memory_space<vmem>>, vector<1x128x384xbf16>
    %15 = vector.shape_cast %14 : vector<1x128x384xbf16> to vector<128x384xbf16>
    %cst_14 = arith.constant dense<0.000000e+00> : vector<8x384xf32>
    %16 = tpu.matmul %13, %15, %cst_14 {dimension_numbers = #tpu.dot_dimension_numbers<[1], [0], [0], [1], [0, 0, 1, 1], [], []>} : vector<8x128xbf16>, vector<128x384xbf16>, vector<8x384xf32> -> vector<8x384xf32>
    %c0_15 = arith.constant 0 : index
    %c0_16 = arith.constant 0 : index
    %c0_17 = arith.constant 0 : index
    %17 = vector.load %arg6[%c0_15, %c0_16, %c0_17] : memref<1x1x384xf32, #tpu.memory_space<vmem>>, vector<1x1x384xf32>
    %18 = vector.shape_cast %17 : vector<1x1x384xf32> to vector<1x384xf32>
    %19 = vector.broadcast %18 : vector<1x384xf32> to vector<8x384xf32>
    %20 = arith.addf %16, %19 : vector<8x384xf32>
    %21 = vector.extract_strided_slice %12 {offsets = [0, 0], sizes = [8, 128], strides = [1, 1]} : vector<8x384xf32> to vector<8x128xf32>
    %22 = vector.extract_strided_slice %20 {offsets = [0, 0], sizes = [8, 128], strides = [1, 1]} : vector<8x384xf32> to vector<8x128xf32>
    %23 = arith.addf %21, %22 : vector<8x128xf32>
    %24 = arith.negf %23 : vector<8x128xf32>
    %25 = math.exp %24 : vector<8x128xf32>
    %cst_18 = arith.constant 1.000000e+00 : f32
    %26 = vector.broadcast %cst_18 : f32 to vector<8x128xf32>
    %27 = arith.addf %26, %25 : vector<8x128xf32>
    %28 = arith.divf %26, %27 : vector<8x128xf32>
    %29 = vector.extract_strided_slice %12 {offsets = [0, 128], sizes = [8, 128], strides = [1, 1]} : vector<8x384xf32> to vector<8x128xf32>
    %30 = vector.extract_strided_slice %20 {offsets = [0, 128], sizes = [8, 128], strides = [1, 1]} : vector<8x384xf32> to vector<8x128xf32>
    %31 = arith.addf %29, %30 : vector<8x128xf32>
    %32 = arith.negf %31 : vector<8x128xf32>
    %33 = math.exp %32 : vector<8x128xf32>
    %cst_19 = arith.constant 1.000000e+00 : f32
    %34 = vector.broadcast %cst_19 : f32 to vector<8x128xf32>
    %35 = arith.addf %34, %33 : vector<8x128xf32>
    %36 = arith.divf %34, %35 : vector<8x128xf32>
    %37 = vector.extract_strided_slice %12 {offsets = [0, 256], sizes = [8, 128], strides = [1, 1]} : vector<8x384xf32> to vector<8x128xf32>
    %38 = vector.extract_strided_slice %20 {offsets = [0, 256], sizes = [8, 128], strides = [1, 1]} : vector<8x384xf32> to vector<8x128xf32>
    %39 = arith.mulf %28, %38 : vector<8x128xf32>
    %40 = arith.addf %37, %39 : vector<8x128xf32>
    %41 = math.tanh %40 : vector<8x128xf32>
    %cst_20 = arith.constant 1.000000e+00 : f32
    %42 = vector.broadcast %cst_20 : f32 to vector<8x128xf32>
    %43 = arith.subf %42, %36 : vector<8x128xf32>
    %44 = arith.mulf %43, %41 : vector<8x128xf32>
    %45 = arith.mulf %36, %5 : vector<8x128xf32>
    %46 = arith.addf %44, %45 : vector<8x128xf32>
    %c0_21 = arith.constant 0 : index
    %c0_22 = arith.constant 0 : index
    %c0_23 = arith.constant 0 : index
    %47 = vector.load %arg7[%c0_21, %c0_22, %c0_23] : memref<1x8x128xf32, #tpu.memory_space<vmem>>, vector<1x8x128xf32>
    %48 = vector.shape_cast %47 : vector<1x8x128xf32> to vector<8x128xf32>
    %49 = vector.shape_cast %46 : vector<8x128xf32> to vector<1x8x128xf32>
    tpu.vector_store %arg7[%c0_21, %c0_22, %c0_23], %49 {strides = array<i32>} : memref<1x8x128xf32, #tpu.memory_space<vmem>>, vector<1x8x128xf32>,
    %50 = arith.truncf %46 : vector<8x128xf32> to vector<8x128xbf16>
    %c0_24 = arith.constant 0 : index
    %c0_25 = arith.constant 0 : index
    %51 = vector.load %arg9[%c0_24, %c0_25] : memref<8x128xbf16, #tpu.memory_space<vmem>>, vector<8x128xbf16>
    tpu.vector_store %arg9[%c0_24, %c0_25], %50 {strides = array<i32>} : memref<8x128xbf16, #tpu.memory_space<vmem>>, vector<8x128xbf16>,
    %c1_i32 = arith.constant 1 : i32
    %52 = arith.cmpi eq, %arg0, %c1_i32 : i32
    %53 = arith.extui %52 : i1 to i32
    %c0_i32_26 = arith.constant 0 : i32
    %54 = arith.cmpi ne, %53, %c0_i32_26 : i32
    scf.if %54 {
      %55 = arith.truncf %46 : vector<8x128xf32> to vector<8x128xbf16>
      %c0_27 = arith.constant 0 : index
      %c0_28 = arith.constant 0 : index
      %56 = vector.load %arg8[%c0_27, %c0_28] : memref<8x128xbf16, #tpu.memory_space<vmem>>, vector<8x128xbf16>
      tpu.vector_store %arg8[%c0_27, %c0_28], %55 {strides = array<i32>} : memref<8x128xbf16, #tpu.memory_space<vmem>>, vector<8x128xbf16>,
    } else {
    }
    return
  }
  func.func @transform_0(%arg0: i32) -> (i32, i32) {
    %c0_i32 = arith.constant 0 : i32
    %c0_i32_0 = arith.constant 0 : i32
    %c0_i32_1 = arith.constant 0 : i32
    return %c0_i32, %c0_i32_0 : i32, i32
  }
  func.func @transform_1(%arg0: i32) -> (i32, i32, i32) {
    %c0_i32 = arith.constant 0 : i32
    %c0_i32_0 = arith.constant 0 : i32
    %c0_i32_1 = arith.constant 0 : i32
    return %arg0, %c0_i32, %c0_i32_0 : i32, i32, i32
  }
  func.func @transform_2(%arg0: i32) -> (i32, i32, i32) {
    %c0_i32 = arith.constant 0 : i32
    %c0_i32_0 = arith.constant 0 : i32
    %c0_i32_1 = arith.constant 0 : i32
    return %arg0, %c0_i32, %c0_i32_0 : i32, i32, i32
  }
  func.func @transform_3(%arg0: i32) -> (i32, i32, i32) {
    %c0_i32 = arith.constant 0 : i32
    %c0_i32_0 = arith.constant 0 : i32
    %c0_i32_1 = arith.constant 0 : i32
    return %arg0, %c0_i32, %c0_i32_0 : i32, i32, i32
  }
  func.func @transform_4(%arg0: i32) -> (i32, i32, i32) {
    %c0_i32 = arith.constant 0 : i32
    %c0_i32_0 = arith.constant 0 : i32
    %c0_i32_1 = arith.constant 0 : i32
    return %arg0, %c0_i32, %c0_i32_0 : i32, i32, i32
  }
  func.func @transform_5(%arg0: i32) -> (i32, i32, i32) {
    %c0_i32 = arith.constant 0 : i32
    %c0_i32_0 = arith.constant 0 : i32
    %c0_i32_1 = arith.constant 0 : i32
    return %arg0, %c0_i32, %c0_i32_0 : i32, i32, i32
  }
  func.func @transform_6(%arg0: i32) -> (i32, i32, i32) {
    %c0_i32 = arith.constant 0 : i32
    %c0_i32_0 = arith.constant 0 : i32
    %c0_i32_1 = arith.constant 0 : i32
    return %arg0, %c0_i32, %c0_i32_0 : i32, i32, i32
  }
  func.func @transform_7(%arg0: i32) -> (i32, i32) {
    %c0_i32 = arith.constant 0 : i32
    %c0_i32_0 = arith.constant 0 : i32
    %c0_i32_1 = arith.constant 0 : i32
    return %c0_i32, %c0_i32_0 : i32, i32
  }
}

</mosaic_0001>

<llo_original>
// kernel: decoder_forward.3
$region0: #{decoder_forward.3}
  #allocation0 [shape = 'u32[]', space=smem, size = 0x4, offset = 0x4, fixed_abs, tag = 'smem constant byte address 0x4 - core index']
  #allocation1 [shape = 'u32[144,128]{1,0:T(1,128)}', space=vmem, size = 0x12000, scoped, tag = 'internal scratch']
  #allocation2 [shape = 'f32[8,1]{1,0:T(8,128)}', space=vmem, size = 0x1000, scoped, tag = 'scratch operand']
  #allocation3 [shape = 'f32[8,1]{1,0:T(8,128)}', space=vmem, size = 0x1000, scoped, tag = 'scratch operand']
  %s0 = inlined_call_operand.vmem [shape: bf16[8,128], index: 0, kind: input, shape index: {}]
  %s1 = inlined_call_operand.vmem [shape: bf16[128,512], index: 1, kind: input, shape index: {}]
  %s2 = inlined_call_operand.vmem [shape: f32[1,512], index: 2, kind: input, shape index: {}]
  %s3 = inlined_call_operand.hbm [shape: f32[8,512], index: 3, kind: output, shape index: {}]
  %s4 = sld [smem:[#allocation0]]
  $region94: #{decoder_forward.3} parent=0
    _
  %s6 = ssub.s32 1, %s4
  %s7 = scalar_select 0, %s6, %s4
  $region1: #{decoder_forward.3} parent=0
    #allocation4 [shape = 'u8[65536]{0}', space=vmem, size = 0x10000, scoped, tag = 'input window, operand 1']
    #allocation5 [shape = 'u8[16384]{0}', space=vmem, size = 0x4000, scoped, tag = 'output window, operand 0, single buffered']
    #allocation6 [shape = 's32[2]{0}', space=sflag, size = 0x8, scoped, tag = 'scoped memory for decoder_forward.3']
    %8 = vsyncpa [#allocation6], 0
    loop: start=0, step=1, limit=6
    $region2: #{decoder_forward.3} parent=1 // loop_pre_header
      _
    $region3: #{decoder_forward.3} parent=1 // loop_header
      %s10 = sphi 0, %s14
      %p11 = scmp.ge.s32.totalorder %s10, 6
      %s18 = sphi 0, %s18
      %s20 = sphi 0, %s18
      %s21 = sphi 0, %s20
      %s35 = sphi 0, %s21
      %s41 = sphi 0, %s43
      %s44 = sphi 0, %s41
      %s45 = sphi 0, %s44
      %s61 = sphi 0, %s45
      %s67 = sphi 0, %s69
      %s70 = sphi 0, %s67
      %s71 = sphi 0, %s70
      %s87 = sphi 0, %s71
      %s91 = sphi 0, %s91
      %s93 = sphi 0, %s91
      %s94 = sphi 0, %s93
      %s108 = sphi 0, %s94
    $region4: #{decoder_forward.3} parent=1 // loop_header_branch
      %13 = sbr.rel (%p11) target = $region8
    $region5: #{decoder_forward.3} parent=1 // loop_body
      %s15 = ssub.s32 %s10, 1
      %s16 = ssub.s32 %s10, 2
      %s17 = sadd.s32 %s10, 1
      %s19 = sadd.s32 %s18, 1
      %p22 = scmp.eq.s32.totalorder %s10, 3
      %p23 = scmp.ne.s32.totalorder %s18, %s20
      %p24 = scmp.eq.s32.totalorder %s10, 0
      %p25 = por %p23, %p24
      %p26 = scmp.ne.s32.totalorder %s18, %s20
      %p27 = scmp.eq.s32.totalorder %s15, 3
      %p28 = por %p26, %p27
      %p29 = scmp.ne.s32.totalorder %s20, %s21
      %p30 = scmp.eq.s32.totalorder %s15, 0
      %p31 = por %p29, %p30
      %p32 = scmp.ne.s32.totalorder %s20, %s21
      %p33 = scmp.eq.s32.totalorder %s16, 3
      %p34 = por %p32, %p33
      %p36 = scmp.ne.s32.totalorder %s21, %s35
      %p37 = scmp.eq.s32.totalorder %s16, 0
      %p38 = por %p36, %p37
      %s39 = ssub.s32 %s10, %s17
      %p40 = scmp.eq.s32.totalorder %s39, 0
      %s42 = sadd.s32 %s41, 1
      %s43 = scalar_select %p40, %s41, %s42
      %p46 = pneg %p40
      %p47 = scmp.eq.s32.totalorder %s10, 3
      %p48 = por %p46, %p47
      %p49 = scmp.ne.s32.totalorder %s41, %s44
      %p50 = scmp.eq.s32.totalorder %s10, 0
      %p51 = por %p49, %p50
      %p52 = scmp.ne.s32.totalorder %s41, %s44
      %p53 = scmp.eq.s32.totalorder %s15, 3
      %p54 = por %p52, %p53
      %p55 = scmp.ne.s32.totalorder %s44, %s45
      %p56 = scmp.eq.s32.totalorder %s15, 0
      %p57 = por %p55, %p56
      %p58 = scmp.ne.s32.totalorder %s44, %s45
      %p59 = scmp.eq.s32.totalorder %s16, 3
      %p60 = por %p58, %p59
      %p62 = scmp.ne.s32.totalorder %s45, %s61
      %p63 = scmp.eq.s32.totalorder %s16, 0
      %p64 = por %p62, %p63
      %s65 = ssub.s32 %s10, %s17
      %p66 = scmp.eq.s32.totalorder %s65, 0
      %s68 = sadd.s32 %s67, 1
      %s69 = scalar_select %p66, %s67, %s68
      %p72 = pneg %p66
      %p73 = scmp.eq.s32.totalorder %s10, 3
      %p74 = por %p72, %p73
      %p75 = scmp.ne.s32.totalorder %s67, %s70
      %p76 = scmp.eq.s32.totalorder %s10, 0
      %p77 = por %p75, %p76
      %p78 = scmp.ne.s32.totalorder %s67, %s70
      %p79 = scmp.eq.s32.totalorder %s15, 3
      %p80 = por %p78, %p79
      %p81 = scmp.ne.s32.totalorder %s70, %s71
      %p82 = scmp.eq.s32.totalorder %s15, 0
      %p83 = por %p81, %p82
      %p84 = scmp.ne.s32.totalorder %s70, %s71
      %p85 = scmp.eq.s32.totalorder %s16, 3
      %p86 = por %p84, %p85
      %p88 = scmp.ne.s32.totalorder %s71, %s87
      %p89 = scmp.eq.s32.totalorder %s16, 0
      %p90 = por %p88, %p89
      %s92 = sadd.s32 %s91, 1
      %p95 = scmp.eq.s32.totalorder %s10, 3
      %p96 = scmp.ne.s32.totalorder %s91, %s93
      %p97 = scmp.eq.s32.totalorder %s10, 0
      %p98 = por %p96, %p97
      %p99 = scmp.ne.s32.totalorder %s91, %s93
      %p100 = scmp.eq.s32.totalorder %s15, 3
      %p101 = por %p99, %p100
      %p102 = scmp.ne.s32.totalorder %s93, %s94
      %p103 = scmp.eq.s32.totalorder %s15, 0
      %p104 = por %p102, %p103
      %p105 = scmp.ne.s32.totalorder %s93, %s94
      %p106 = scmp.eq.s32.totalorder %s16, 3
      %p107 = por %p105, %p106
      %p109 = scmp.ne.s32.totalorder %s94, %s108
      %p110 = scmp.eq.s32.totalorder %s16, 0
      %p111 = por %p109, %p110
      %p112 = scmp.le.s32.totalorder 1, %s10
      %p113 = scmp.lt.s32.totalorder %s10, 5
      %p114 = pnand %p112, %p113
      %p115 = pneg %p114
      // Predicated region
      $region9: #{decoder_forward.3} parent=5 // pred_check
        _
      $region10: #{decoder_forward.3} parent=5 // pred_check_branch
        %117 = sbr.rel (%p114) target = $region12
      $region11: #{decoder_forward.3} parent=5 // pred_region
        %s118 = ssub.s32 %s10, 1
        // Predicated region
        $region13: #{decoder_forward.3} parent=11 // pred_check
          %p119 = pneg %p31
        $region14: #{decoder_forward.3} parent=11 // pred_check_branch
          %121 = sbr.rel (%p119) target = $region16
        $region15: #{decoder_forward.3} parent=11 // pred_region
          _
        $region16: #{decoder_forward.3} parent=11 // pred_fallthru
          _
      $region12: #{decoder_forward.3} parent=5 // pred_fallthru
        _
      %p122 = scmp.lt.s32.totalorder %s10, 4
      // Predicated region
      $region17: #{decoder_forward.3} parent=5 // pred_check
        %p123 = pneg %p122
      $region18: #{decoder_forward.3} parent=5 // pred_check_branch
        %125 = sbr.rel (%p123) target = $region20
      $region19: #{decoder_forward.3} parent=5 // pred_region
        // Predicated region
        $region21: #{decoder_forward.3} parent=19 // pred_check
          %p126 = pneg %p51
        $region22: #{decoder_forward.3} parent=19 // pred_check_branch
          %128 = sbr.rel (%p126) target = $region24
        $region23: #{decoder_forward.3} parent=19 // pred_region
          %s129 = sand.u32 %s41, 1
          %s130 = sand.u32 %s41, 1
          %s131 = smul.addr %s130, 64
          %s132 = scalar_lea.vmem [#allocation4], %s131
          %s133 = smul.addr %s10, 4
          %s134 = scalar_lea.vmem %s1, %s133
          // Predicated region
          $region25: #{decoder_forward.3} parent=23 // pred_check
            _
          $region26: #{decoder_forward.3} parent=23 // pred_check_branch
            %136 = sbr.rel (0) target = $region28
          $region27: #{decoder_forward.3} parent=23 // pred_region
            // Predicated region
            $region29: #{decoder_forward.3} parent=27 // pred_check
              _
            $region30: #{decoder_forward.3} parent=27 // pred_check_branch
              %138 = sbr.rel target = $region32
            $region31: #{decoder_forward.3} parent=27 // pred_region
              // Predicated region
              $region44: #{decoder_forward.3} parent=31 // pred_check
                _
              $region45: #{decoder_forward.3} parent=31 // pred_check_branch
                %183 = sbr.rel (0) target = $region47
              $region46: #{decoder_forward.3} parent=31 // pred_region
                loop: start=0, step=1, limit=1
                $region48: #{decoder_forward.3} parent=46 // loop_pre_header
                  _
                $region49: #{decoder_forward.3} parent=46 // loop_header
                  %s185 = sphi 0, %s189
                  %p186 = scmp.ge.s32.totalorder %s185, 1
                  %s190 = sphi %s134, %s134
                  %s191 = sphi %s132, %s132
                $region50: #{decoder_forward.3} parent=46 // loop_header_branch
                  %188 = sbr.rel (%p186) target = $region54
                $region51: #{decoder_forward.3} parent=46 // loop_body
                  _
                $region52: #{decoder_forward.3} parent=46 // loop_footer
                  %s189 = sadd.s32 1, %s185
                $region53: #{decoder_forward.3} parent=46 // loop_footer_branch
                  %184 = sbr.rel target = $region49
                $region54: #{decoder_forward.3} parent=46 // loop_exit
                  _
                loop: start=0, step=1, limit=1
                $region55: #{decoder_forward.3} parent=46 // loop_pre_header
                  _
                $region56: #{decoder_forward.3} parent=46 // loop_header
                  %s194 = sphi 0, %s198
                  %p195 = scmp.ge.s32.totalorder %s194, 1
                  %s199 = sphi %s134, %s134
                  %s200 = sphi %s132, %s132
                $region57: #{decoder_forward.3} parent=46 // loop_header_branch
                  %197 = sbr.rel (%p195) target = $region61
                $region58: #{decoder_forward.3} parent=46 // loop_body
                  %v201 = vld [vmem:[%s199] sm:$0xf]
                  %202 = vst [vmem:[%s200] sm:$0xf] %v201
                  %v203 = vld [vmem:[%s199 + $0x10] sm:$0xf]
                  %204 = vst [vmem:[%s200 + $0x4] sm:$0xf] %v203
                  %v205 = vld [vmem:[%s199 + $0x20] sm:$0xf]
                  %206 = vst [vmem:[%s200 + $0x8] sm:$0xf] %v205
                  %v207 = vld [vmem:[%s199 + $0x30] sm:$0xf]
                  %208 = vst [vmem:[%s200 + $0xc] sm:$0xf] %v207
                  %v209 = vld [vmem:[%s199 + $0x40] sm:$0xf]
                  %210 = vst [vmem:[%s200 + $0x10] sm:$0xf] %v209
                  %v211 = vld [vmem:[%s199 + $0x50] sm:$0xf]
                  %212 = vst [vmem:[%s200 + $0x14] sm:$0xf] %v211
                  %v213 = vld [vmem:[%s199 + $0x60] sm:$0xf]
                  %214 = vst [vmem:[%s200 + $0x18] sm:$0xf] %v213
                  %v215 = vld [vmem:[%s199 + $0x70] sm:$0xf]
                  %216 = vst [vmem:[%s200 + $0x1c] sm:$0xf] %v215
                  %v217 = vld [vmem:[%s199 + $0x80] sm:$0xf]
                  %218 = vst [vmem:[%s200 + $0x20] sm:$0xf] %v217
                  %v219 = vld [vmem:[%s199 + $0x90] sm:$0xf]
                  %220 = vst [vmem:[%s200 + $0x24] sm:$0xf] %v219
                  %v221 = vld [vmem:[%s199 + $0xa0] sm:$0xf]
                  %222 = vst [vmem:[%s200 + $0x28] sm:$0xf] %v221
                  %v223 = vld [vmem:[%s199 + $0xb0] sm:$0xf]
                  %224 = vst [vmem:[%s200 + $0x2c] sm:$0xf] %v223
                  %v225 = vld [vmem:[%s199 + $0xc0] sm:$0xf]
                  %226 = vst [vmem:[%s200 + $0x30] sm:$0xf] %v225
                  %v227 = vld [vmem:[%s199 + $0xd0] sm:$0xf]
                  %228 = vst [vmem:[%s200 + $0x34] sm:$0xf] %v227
                  %v229 = vld [vmem:[%s199 + $0xe0] sm:$0xf]
                  %230 = vst [vmem:[%s200 + $0x38] sm:$0xf] %v229
                  %v231 = vld [vmem:[%s199 + $0xf0] sm:$0xf]
                  %232 = vst [vmem:[%s200 + $0x3c] sm:$0xf] %v231
                $region59: #{decoder_forward.3} parent=46 // loop_footer
                  %s198 = sadd.s32 1, %s194
                $region60: #{decoder_forward.3} parent=46 // loop_footer_branch
                  %193 = sbr.rel target = $region56
                $region61: #{decoder_forward.3} parent=46 // loop_exit
                  _
              $region47: #{decoder_forward.3} parent=31 // pred_fallthru
                _
            $region32: #{decoder_forward.3} parent=27 // pred_fallthru
              _
            // Predicated region
            $region33: #{decoder_forward.3} parent=27 // pred_check
              _
            $region34: #{decoder_forward.3} parent=27 // pred_check_branch
              %140 = sbr.rel (0) target = $region36
            $region35: #{decoder_forward.3} parent=27 // pred_region
              loop: start=0, step=1, limit=1
              $region37: #{decoder_forward.3} parent=35 // loop_pre_header
                _
              $region38: #{decoder_forward.3} parent=35 // loop_header
                %s143 = sphi 0, %s147
                %p144 = scmp.ge.s32.totalorder %s143, 1
                %s148 = sphi %s134, %s134
                %s149 = sphi %s132, %s132
              $region39: #{decoder_forward.3} parent=35 // loop_header_branch
                %146 = sbr.rel (%p144) target = $region43
              $region40: #{decoder_forward.3} parent=35 // loop_body
                %v150 = vld [vmem:[%s148] sm:$0xf]
                %151 = vst [vmem:[%s149] sm:$0xf] %v150
                %v152 = vld [vmem:[%s148 + $0x10] sm:$0xf]
                %153 = vst [vmem:[%s149 + $0x4] sm:$0xf] %v152
                %v154 = vld [vmem:[%s148 + $0x20] sm:$0xf]
                %155 = vst [vmem:[%s149 + $0x8] sm:$0xf] %v154
                %v156 = vld [vmem:[%s148 + $0x30] sm:$0xf]
                %157 = vst [vmem:[%s149 + $0xc] sm:$0xf] %v156
                %v158 = vld [vmem:[%s148 + $0x40] sm:$0xf]
                %159 = vst [vmem:[%s149 + $0x10] sm:$0xf] %v158
                %v160 = vld [vmem:[%s148 + $0x50] sm:$0xf]
                %161 = vst [vmem:[%s149 + $0x14] sm:$0xf] %v160
                %v162 = vld [vmem:[%s148 + $0x60] sm:$0xf]
                %163 = vst [vmem:[%s149 + $0x18] sm:$0xf] %v162
                %v164 = vld [vmem:[%s148 + $0x70] sm:$0xf]
                %165 = vst [vmem:[%s149 + $0x1c] sm:$0xf] %v164
                %v166 = vld [vmem:[%s148 + $0x80] sm:$0xf]
                %167 = vst [vmem:[%s149 + $0x20] sm:$0xf] %v166
                %v168 = vld [vmem:[%s148 + $0x90] sm:$0xf]
                %169 = vst [vmem:[%s149 + $0x24] sm:$0xf] %v168
                %v170 = vld [vmem:[%s148 + $0xa0] sm:$0xf]
                %171 = vst [vmem:[%s149 + $0x28] sm:$0xf] %v170
                %v172 = vld [vmem:[%s148 + $0xb0] sm:$0xf]
                %173 = vst [vmem:[%s149 + $0x2c] sm:$0xf] %v172
                %v174 = vld [vmem:[%s148 + $0xc0] sm:$0xf]
                %175 = vst [vmem:[%s149 + $0x30] sm:$0xf] %v174
                %v176 = vld [vmem:[%s148 + $0xd0] sm:$0xf]
                %177 = vst [vmem:[%s149 + $0x34] sm:$0xf] %v176
                %v178 = vld [vmem:[%s148 + $0xe0] sm:$0xf]
                %179 = vst [vmem:[%s149 + $0x38] sm:$0xf] %v178
                %v180 = vld [vmem:[%s148 + $0xf0] sm:$0xf]
                %181 = vst [vmem:[%s149 + $0x3c] sm:$0xf] %v180
              $region41: #{decoder_forward.3} parent=35 // loop_footer
                %s147 = sadd.s32 1, %s143
              $region42: #{decoder_forward.3} parent=35 // loop_footer_branch
                %142 = sbr.rel target = $region38
              $region43: #{decoder_forward.3} parent=35 // loop_exit
                _
            $region36: #{decoder_forward.3} parent=27 // pred_fallthru
              _
          $region28: #{decoder_forward.3} parent=23 // pred_fallthru
            _
          %233 = vnop
        $region24: #{decoder_forward.3} parent=19 // pred_fallthru
          _
        // Predicated region
        $region62: #{decoder_forward.3} parent=19 // pred_check
          %p234 = pneg %p77
        $region63: #{decoder_forward.3} parent=19 // pred_check_branch
          %236 = sbr.rel (%p234) target = $region65
        $region64: #{decoder_forward.3} parent=19 // pred_region
          %p237 = scmp.lt.s32.totalorder %s10, 3
          %s238 = scalar_select %p237, %s10, 3
          %s239 = scalar_lea.vmem %s2, %s238
        $region65: #{decoder_forward.3} parent=19 // pred_fallthru
          _
      $region20: #{decoder_forward.3} parent=5 // pred_fallthru
        _
      %p240 = scmp.le.s32.totalorder 1, %s10
      %p241 = scmp.lt.s32.totalorder %s10, 5
      %p242 = pnand %p240, %p241
      %p243 = pneg %p242
      // Predicated region
      $region66: #{decoder_forward.3} parent=5 // pred_check
        _
      $region67: #{decoder_forward.3} parent=5 // pred_check_branch
        %245 = sbr.rel (%p242) target = $region69
      $region68: #{decoder_forward.3} parent=5 // pred_region
        %s246 = ssub.s32 %s10, 1
        %s247 = sand.u32 %s44, 1
        %s248 = sand.u32 %s44, 1
        %s249 = smul.addr %s248, 64
        %s250 = scalar_lea.vmem [#allocation4], %s249
        // Predicated region
        $region70: #{decoder_forward.3} parent=68 // pred_check
          %p251 = pneg %p57
        $region71: #{decoder_forward.3} parent=68 // pred_check_branch
          %253 = sbr.rel (%p251) target = $region73
        $region72: #{decoder_forward.3} parent=68 // pred_region
          _
        $region73: #{decoder_forward.3} parent=68 // pred_fallthru
          _
        %p254 = pneg %p31
        %p255 = pneg %p28
        %s256 = sand.u32 %s44, 1
        %s257 = sand.u32 %s44, 1
        %s258 = smul.addr %s257, 64
        %s259 = scalar_lea.vmem [#allocation4], %s258
        %p260 = pneg %p57
        %p261 = pneg %p54
        %p262 = scmp.lt.s32.totalorder %s15, 3
        %s263 = scalar_select %p262, %s15, 3
        %s264 = scalar_lea.vmem %s2, %s263
        %p265 = pneg %p83
        %p266 = pneg %p80
        %p267 = pneg %p104
        %p268 = pneg %p101
        %p269 = scmp.lt.s32.totalorder %s15, 3
        %s270 = scalar_select %p269, %s15, 3
        %s271 = scalar_lea.vmem %s2, %s270
        %p273 = scmp.eq.s32.totalorder %s15, 0
        // Predicated region
        $region74: #{decoder_forward.3} parent=68 // pred_check
          %p274 = pneg %p273
        $region75: #{decoder_forward.3} parent=68 // pred_check_branch
          %276 = sbr.rel (%p274) target = $region77
        $region76: #{decoder_forward.3} parent=68 // pred_region
          %vm277 = vcmask 7168
          %278 = vst.msk [vmem:[#allocation2] sm:$0xff] %vm277, -inf
          %279 = vst.msk [vmem:[#allocation3] sm:$0xff] %vm277, 0.0
        $region77: #{decoder_forward.3} parent=68 // pred_fallthru
          _
        %v280 = vld [vmem:[%s0] sm:$0xf]
        %v281 = vld [vmem:[%s250] sm:$0xf]
        %v282 = vld [vmem:[%s250 + $0x4] sm:$0xf]
        %v283 = vld [vmem:[%s250 + $0x8] sm:$0xf]
        %v284 = vld [vmem:[%s250 + $0xc] sm:$0xf]
        %v285 = vld [vmem:[%s250 + $0x10] sm:$0xf]
        %v286 = vld [vmem:[%s250 + $0x14] sm:$0xf]
        %v287 = vld [vmem:[%s250 + $0x18] sm:$0xf]
        %v288 = vld [vmem:[%s250 + $0x1c] sm:$0xf]
        %v289 = vld [vmem:[%s250 + $0x20] sm:$0xf]
        %v290 = vld [vmem:[%s250 + $0x24] sm:$0xf]
        %v291 = vld [vmem:[%s250 + $0x28] sm:$0xf]
        %v292 = vld [vmem:[%s250 + $0x2c] sm:$0xf]
        %v293 = vld [vmem:[%s250 + $0x30] sm:$0xf]
        %v294 = vld [vmem:[%s250 + $0x34] sm:$0xf]
        %v295 = vld [vmem:[%s250 + $0x38] sm:$0xf]
        %v296 = vld [vmem:[%s250 + $0x3c] sm:$0xf]
        %v297 = vld [vmem:[%s271] sm:$0x1]
        %v299 = vlaneseq
        %v300 = vshrl.u32 %v299, 7
        %v301 = vsub.s32 0, %v300
        %v302 = vrot.slane %v297, %v301
        %v320 = vunpack.c.l.b16 %v281
        %v321 = vunpack.c.l.b16 %v282
        %v322 = vunpack.c.l.b16 %v283
        %v323 = vunpack.c.l.b16 %v284
        %v324 = vunpack.c.l.b16 %v285
        %v325 = vunpack.c.l.b16 %v286
        %v326 = vunpack.c.l.b16 %v287
        %v327 = vunpack.c.l.b16 %v288
        %v328 = vunpack.c.l.b16 %v289
        %v329 = vunpack.c.l.b16 %v290
        %v330 = vunpack.c.l.b16 %v291
        %v331 = vunpack.c.l.b16 %v292
        %v332 = vunpack.c.l.b16 %v293
        %v333 = vunpack.c.l.b16 %v294
        %v334 = vunpack.c.l.b16 %v295
        %v335 = vunpack.c.l.b16 %v296
        %v336 = vpack.c.b16 %v321, %v320
        %v337 = vpack.c.b16 %v323, %v322
        %v338 = vpack.c.b16 %v325, %v324
        %v339 = vpack.c.b16 %v327, %v326
        %v340 = vpack.c.b16 %v329, %v328
        %v341 = vpack.c.b16 %v331, %v330
        %v342 = vpack.c.b16 %v333, %v332
        %v343 = vpack.c.b16 %v335, %v334
        %352 = vmatprep.subr.bf16.mxu0 0
        %353 = vmatpush1.bf16.msra.mxu0 %v336
        %354 = vmatprep.subr.bf16.mxu0 0
        %355 = vmatpush1.bf16.msra.mxu0 %v337
        %356 = vmatprep.subr.bf16.mxu0 0
        %357 = vmatpush1.bf16.msra.mxu0 %v338
        %358 = vmatprep.subr.bf16.mxu0 0
        %359 = vmatpush1.bf16.msra.mxu0 %v339
        %360 = vmatprep.subr.bf16.mxu0 0
        %361 = vmatpush1.bf16.msra.mxu0 %v340
        %362 = vmatprep.subr.bf16.mxu0 0
        %363 = vmatpush1.bf16.msra.mxu0 %v341
        %364 = vmatprep.subr.bf16.mxu0 0
        %365 = vmatpush1.bf16.msra.mxu0 %v342
        %366 = vmatprep.subr.bf16.mxu0 0
        %367 = vmatpush1.bf16.msra.mxu0 %v343
        %368 = vmatprep.subr.bf16.mxu0 0
        %369 = vmatpush1.bf16.msra.mxu0 0
        %370 = vmatprep.subr.bf16.mxu0 0
        %371 = vmatpush1.bf16.msra.mxu0 0
        %372 = vmatprep.subr.bf16.mxu0 0
        %373 = vmatpush1.bf16.msra.mxu0 0
        %374 = vmatprep.subr.bf16.mxu0 0
        %375 = vmatpush1.bf16.msra.mxu0 0
        %376 = vmatprep.subr.bf16.mxu0 0
        %377 = vmatpush1.bf16.msra.mxu0 0
        %378 = vmatprep.subr.bf16.mxu0 0
        %379 = vmatpush1.bf16.msra.mxu0 0
        %380 = vmatprep.subr.bf16.mxu0 0
        %381 = vmatpush1.bf16.msra.mxu0 0
        %382 = vmatprep.subr.bf16.mxu0 0
        %383 = vmatpush1.bf16.msra.mxu0 0
        %384 = vmatprep.mubr.bf16.mxu0 0
        %385 = vmatmul.mubr.bf16.gmra.mrb[0].mxu0 %v280
        %v386 = vpop.f32.mrb[0].mxu0
        %v387 = vadd.f32 %v302, %v386
        %v388 = vpop.f32.mrb[0].mxu0
        %v389 = vpop.f32.mrb[0].mxu0
        %v390 = vpop.f32.mrb[0].mxu0
        %391 = vdwg.mxu0
        %v392 = vld [vmem:[#allocation2] sm:$0xff]
        %393 = vmax.xlane.f32.xlu0 %v387
        %v394 = vpop.xlane.xlu0 %393
        %v395 = vmax.f32 %v392, %v394
        %v396 = vld [vmem:[#allocation3] sm:$0xff]
        %v397 = vsub.f32 %v392, %v395
        %v398 = vmul.f32 %v397, 1.442695
        %v399 = vpow.pop %v398
        %v400 = vmul.f32 %v396, %v399
        %402 = vset.pattern.permute.xlu0 0
        %403 = vperm.xlu0 %402, %v395
        %v404 = vpop.permute.xlu0 %403
        %v406 = vsub.f32 %v387, %v404
        %v407 = vmul.f32 %v406, 1.442695
        %v408 = vpow.pop %v407
        %409 = vadd.xlane.f32.xlu0 %v408
        %v410 = vpop.xlane.xlu0 %409
        %v411 = vadd.f32 %v400, %v410
        %vm412 = vcmask 7168
        %413 = vst.msk [vmem:[#allocation3] sm:$0xff] %vm412, %v411
        %414 = vst.msk [vmem:[#allocation2] sm:$0xff] %vm412, %v395
        %s415 = smul.u32 %s15, 128
        %s416 = sshra.s32 %s415, 7
        %s417 = sand.u32 %s415, 127
        %s418 = smul.addr %s416, 8
        %s419 = scalar_lea.vmem [#allocation5], %s418
        %420 = vst [vmem:[%s419] sm:$0xff] %v387
        %p421 = scmp.eq.s32.totalorder %s15, 3
        // Predicated region
        $region78: #{decoder_forward.3} parent=68 // pred_check
          %p422 = pneg %p421
        $region79: #{decoder_forward.3} parent=68 // pred_check_branch
          %424 = sbr.rel (%p422) target = $region81
        $region80: #{decoder_forward.3} parent=68 // pred_region
          %v425 = vld [vmem:[#allocation2] sm:$0xff]
          %v426 = vld [vmem:[#allocation3] sm:$0xff]
          %v427 = vlog2.pop %v426
          %v428 = vmul.f32 %v427, 0.6931472
          %v429 = vadd.f32 %v425, %v428
          %v430 = vld [vmem:[#allocation5] sm:$0xff]
          %v431 = vld [vmem:[#allocation5 + $0x8] sm:$0xff]
          %v432 = vld [vmem:[#allocation5 + $0x10] sm:$0xff]
          %v433 = vld [vmem:[#allocation5 + $0x18] sm:$0xff]
          %435 = vset.pattern.permute.xlu0 0
          %436 = vperm.xlu0 %435, %v429
          %v437 = vpop.permute.xlu0 %436
          %v439 = vsub.f32 %v430, %v437
          %v440 = vsub.f32 %v431, %v437
          %v441 = vsub.f32 %v432, %v437
          %v442 = vsub.f32 %v433, %v437
          %443 = vst [vmem:[#allocation5] sm:$0xff] %v439
          %444 = vst [vmem:[#allocation5 + $0x8] sm:$0xff] %v440
          %445 = vst [vmem:[#allocation5 + $0x10] sm:$0xff] %v441
          %446 = vst [vmem:[#allocation5 + $0x18] sm:$0xff] %v442
        $region81: #{decoder_forward.3} parent=68 // pred_fallthru
          _
        // Predicated region
        $region82: #{decoder_forward.3} parent=68 // pred_check
          %p447 = pneg %p101
        $region83: #{decoder_forward.3} parent=68 // pred_check_branch
          %449 = sbr.rel (%p447) target = $region85
        $region84: #{decoder_forward.3} parent=68 // pred_region
          %s451 = ssub.s32 512, 512
          %452 = vsyncadd [#allocation6], %s451
          %s454 = sshll.u32 [#allocation5], 4
          %s455 = int_to_ptr.vmem [resolvable:$true] %s454
          %457 = dma.vmem_to_hbm [thread:$0]  %s455, 512, %s3, [#allocation6]
        $region85: #{decoder_forward.3} parent=68 // pred_fallthru
          _
        // Predicated region
        $region86: #{decoder_forward.3} parent=68 // pred_check
          %p458 = pneg %p101
        $region87: #{decoder_forward.3} parent=68 // pred_check_branch
          %460 = sbr.rel (%p458) target = $region89
        $region88: #{decoder_forward.3} parent=68 // pred_region
          %461 = dma.done [#allocation6], 512
        $region89: #{decoder_forward.3} parent=68 // pred_fallthru
          _
      $region69: #{decoder_forward.3} parent=5 // pred_fallthru
        _
      %p462 = scmp.le.s32.totalorder 2, %s10
      // Predicated region
      $region90: #{decoder_forward.3} parent=5 // pred_check
        %p463 = pneg %p462
      $region91: #{decoder_forward.3} parent=5 // pred_check_branch
        %465 = sbr.rel (%p463) target = $region93
      $region92: #{decoder_forward.3} parent=5 // pred_region
        %s466 = ssub.s32 %s10, 2
      $region93: #{decoder_forward.3} parent=5 // pred_fallthru
        _
    $region6: #{decoder_forward.3} parent=1 // loop_footer
      %s14 = sadd.s32 1, %s10
    $region7: #{decoder_forward.3} parent=1 // loop_footer_branch
      %9 = sbr.rel target = $region3
    $region8: #{decoder_forward.3} parent=1 // loop_exit
      _
    %467 = vsyncpa [#allocation6], 1
    %s468 = scalar_lea.sflag [#allocation6], 1
    %469 = vsyncpa %s468, 1

// kernel: decoder_forward.2
$region0: #{decoder_forward.2}
  #allocation0 [shape = 'u32[]', space=smem, size = 0x4, offset = 0x4, fixed_abs, tag = 'smem constant byte address 0x4 - core index']
  #allocation1 [shape = 'u32[144,128]{1,0:T(1,128)}', space=vmem, size = 0x12000, scoped, tag = 'internal scratch']
  #allocation2 [shape = 'bf16[8,128]{1,0:T(8,128)(2,1)}', space=vmem, size = 0x800, scoped, tag = 'scratch operand']
  %s0 = inlined_call_operand.vmem [shape: bf16[8,128], index: 0, kind: input, shape index: {}]
  %s1 = inlined_call_operand.vmem [shape: f32[2,8,128], index: 1, kind: input, shape index: {}]
  %s2 = inlined_call_operand.hbm [shape: bf16[2,128,384], index: 2, kind: input, shape index: {}]
  %s3 = inlined_call_operand.hbm [shape: bf16[2,128,384], index: 3, kind: input, shape index: {}]
  %s4 = inlined_call_operand.vmem [shape: f32[2,1,384], index: 4, kind: input, shape index: {}]
  %s5 = inlined_call_operand.vmem [shape: f32[2,1,384], index: 5, kind: input, shape index: {}]
  %s6 = inlined_call_operand.hbm [shape: f32[2,8,128], index: 6, kind: output, shape index: {0}]
  %s7 = inlined_call_operand.vmem [shape: bf16[8,128], index: 7, kind: output, shape index: {1}]
  %8 = xla_tuple %s6, %s7
  %s9 = sld [smem:[#allocation0]]
  $region81: #{decoder_forward.2} parent=0
    _
  %s11 = ssub.s32 1, %s9
  %s12 = scalar_select 0, %s11, %s9
  $region1: #{decoder_forward.2} parent=0
    #allocation3 [shape = 'u8[196608]{0}', space=vmem, size = 0x30000, scoped, tag = 'input window, operand 2']
    #allocation4 [shape = 's32[2]{0}', space=sflag, size = 0x8, scoped, tag = 'scoped memory for decoder_forward.2']
    #allocation5 [shape = 's32[2]{0}', space=sflag, size = 0x8, scoped, tag = 'scoped memory for decoder_forward.2']
    #allocation6 [shape = 'u8[196608]{0}', space=vmem, size = 0x30000, scoped, tag = 'input window, operand 3']
    #allocation7 [shape = 's32[2]{0}', space=sflag, size = 0x8, scoped, tag = 'scoped memory for decoder_forward.2']
    #allocation8 [shape = 'u8[8192]{0}', space=vmem, size = 0x2000, scoped, tag = 'output window, operand 0']
    %13 = vsyncpa [#allocation4], 0
    %s14 = scalar_lea.sflag [#allocation4], 1
    %15 = vsyncpa %s14, 0
    %16 = vsyncpa [#allocation7], 0
    %s17 = scalar_lea.sflag [#allocation7], 1
    %18 = vsyncpa %s17, 0
    %19 = vsyncpa [#allocation5], 0
    %s20 = scalar_lea.sflag [#allocation5], 1
    %21 = vsyncpa %s20, 0
    loop: start=0, step=1, limit=4
    $region2: #{decoder_forward.2} parent=1 // loop_pre_header
      _
    $region3: #{decoder_forward.2} parent=1 // loop_header
      %s23 = sphi 0, %s27
      %p24 = scmp.ge.s32.totalorder %s23, 4
      %s31 = sphi 0, %s31
      %s33 = sphi 0, %s31
      %s34 = sphi 0, %s33
      %s48 = sphi 0, %s34
      %s54 = sphi 0, %s56
      %s57 = sphi 0, %s54
      %s58 = sphi 0, %s57
      %s74 = sphi 0, %s58
      %s80 = sphi 0, %s82
      %s83 = sphi 0, %s80
      %s84 = sphi 0, %s83
      %s100 = sphi 0, %s84
      %s106 = sphi 0, %s108
      %s109 = sphi 0, %s106
      %s110 = sphi 0, %s109
      %s126 = sphi 0, %s110
      %s132 = sphi 0, %s134
      %s135 = sphi 0, %s132
      %s136 = sphi 0, %s135
      %s152 = sphi 0, %s136
      %s158 = sphi 0, %s160
      %s161 = sphi 0, %s158
      %s162 = sphi 0, %s161
      %s178 = sphi 0, %s162
      %s184 = sphi 0, %s186
      %s187 = sphi 0, %s184
      %s188 = sphi 0, %s187
      %s204 = sphi 0, %s188
      %s208 = sphi 0, %s208
      %s210 = sphi 0, %s208
      %s211 = sphi 0, %s210
      %s225 = sphi 0, %s211
    $region4: #{decoder_forward.2} parent=1 // loop_header_branch
      %26 = sbr.rel (%p24) target = $region8
    $region5: #{decoder_forward.2} parent=1 // loop_body
      %s28 = ssub.s32 %s23, 1
      %s29 = ssub.s32 %s23, 2
      %s30 = sadd.s32 %s23, 1
      %s32 = sadd.s32 %s31, 1
      %p35 = scmp.eq.s32.totalorder %s23, 1
      %p36 = scmp.ne.s32.totalorder %s31, %s33
      %p37 = scmp.eq.s32.totalorder %s23, 0
      %p38 = por %p36, %p37
      %p39 = scmp.ne.s32.totalorder %s31, %s33
      %p40 = scmp.eq.s32.totalorder %s28, 1
      %p41 = por %p39, %p40
      %p42 = scmp.ne.s32.totalorder %s33, %s34
      %p43 = scmp.eq.s32.totalorder %s28, 0
      %p44 = por %p42, %p43
      %p45 = scmp.ne.s32.totalorder %s33, %s34
      %p46 = scmp.eq.s32.totalorder %s29, 1
      %p47 = por %p45, %p46
      %p49 = scmp.ne.s32.totalorder %s34, %s48
      %p50 = scmp.eq.s32.totalorder %s29, 0
      %p51 = por %p49, %p50
      %s52 = ssub.s32 %s23, %s30
      %p53 = scmp.eq.s32.totalorder %s52, 0
      %s55 = sadd.s32 %s54, 1
      %s56 = scalar_select %p53, %s54, %s55
      %p59 = pneg %p53
      %p60 = scmp.eq.s32.totalorder %s23, 1
      %p61 = por %p59, %p60
      %p62 = scmp.ne.s32.totalorder %s54, %s57
      %p63 = scmp.eq.s32.totalorder %s23, 0
      %p64 = por %p62, %p63
      %p65 = scmp.ne.s32.totalorder %s54, %s57
      %p66 = scmp.eq.s32.totalorder %s28, 1
      %p67 = por %p65, %p66
      %p68 = scmp.ne.s32.totalorder %s57, %s58
      %p69 = scmp.eq.s32.totalorder %s28, 0
      %p70 = por %p68, %p69
      %p71 = scmp.ne.s32.totalorder %s57, %s58
      %p72 = scmp.eq.s32.totalorder %s29, 1
      %p73 = por %p71, %p72
      %p75 = scmp.ne.s32.totalorder %s58, %s74
      %p76 = scmp.eq.s32.totalorder %s29, 0
      %p77 = por %p75, %p76
      %s78 = ssub.s32 %s23, %s30
      %p79 = scmp.eq.s32.totalorder %s78, 0
      %s81 = sadd.s32 %s80, 1
      %s82 = scalar_select %p79, %s80, %s81
      %p85 = pneg %p79
      %p86 = scmp.eq.s32.totalorder %s23, 1
      %p87 = por %p85, %p86
      %p88 = scmp.ne.s32.totalorder %s80, %s83
      %p89 = scmp.eq.s32.totalorder %s23, 0
      %p90 = por %p88, %p89
      %p91 = scmp.ne.s32.totalorder %s80, %s83
      %p92 = scmp.eq.s32.totalorder %s28, 1
      %p93 = por %p91, %p92
      %p94 = scmp.ne.s32.totalorder %s83, %s84
      %p95 = scmp.eq.s32.totalorder %s28, 0
      %p96 = por %p94, %p95
      %p97 = scmp.ne.s32.totalorder %s83, %s84
      %p98 = scmp.eq.s32.totalorder %s29, 1
      %p99 = por %p97, %p98
      %p101 = scmp.ne.s32.totalorder %s84, %s100
      %p102 = scmp.eq.s32.totalorder %s29, 0
      %p103 = por %p101, %p102
      %s104 = ssub.s32 %s23, %s30
      %p105 = scmp.eq.s32.totalorder %s104, 0
      %s107 = sadd.s32 %s106, 1
      %s108 = scalar_select %p105, %s106, %s107
      %p111 = pneg %p105
      %p112 = scmp.eq.s32.totalorder %s23, 1
      %p113 = por %p111, %p112
      %p114 = scmp.ne.s32.totalorder %s106, %s109
      %p115 = scmp.eq.s32.totalorder %s23, 0
      %p116 = por %p114, %p115
      %p117 = scmp.ne.s32.totalorder %s106, %s109
      %p118 = scmp.eq.s32.totalorder %s28, 1
      %p119 = por %p117, %p118
      %p120 = scmp.ne.s32.totalorder %s109, %s110
      %p121 = scmp.eq.s32.totalorder %s28, 0
      %p122 = por %p120, %p121
      %p123 = scmp.ne.s32.totalorder %s109, %s110
      %p124 = scmp.eq.s32.totalorder %s29, 1
      %p125 = por %p123, %p124
      %p127 = scmp.ne.s32.totalorder %s110, %s126
      %p128 = scmp.eq.s32.totalorder %s29, 0
      %p129 = por %p127, %p128
      %s130 = ssub.s32 %s23, %s30
      %p131 = scmp.eq.s32.totalorder %s130, 0
      %s133 = sadd.s32 %s132, 1
      %s134 = scalar_select %p131, %s132, %s133
      %p137 = pneg %p131
      %p138 = scmp.eq.s32.totalorder %s23, 1
      %p139 = por %p137, %p138
      %p140 = scmp.ne.s32.totalorder %s132, %s135
      %p141 = scmp.eq.s32.totalorder %s23, 0
      %p142 = por %p140, %p141
      %p143 = scmp.ne.s32.totalorder %s132, %s135
      %p144 = scmp.eq.s32.totalorder %s28, 1
      %p145 = por %p143, %p144
      %p146 = scmp.ne.s32.totalorder %s135, %s136
      %p147 = scmp.eq.s32.totalorder %s28, 0
      %p148 = por %p146, %p147
      %p149 = scmp.ne.s32.totalorder %s135, %s136
      %p150 = scmp.eq.s32.totalorder %s29, 1
      %p151 = por %p149, %p150
      %p153 = scmp.ne.s32.totalorder %s136, %s152
      %p154 = scmp.eq.s32.totalorder %s29, 0
      %p155 = por %p153, %p154
      %s156 = ssub.s32 %s23, %s30
      %p157 = scmp.eq.s32.totalorder %s156, 0
      %s159 = sadd.s32 %s158, 1
      %s160 = scalar_select %p157, %s158, %s159
      %p163 = pneg %p157
      %p164 = scmp.eq.s32.totalorder %s23, 1
      %p165 = por %p163, %p164
      %p166 = scmp.ne.s32.totalorder %s158, %s161
      %p167 = scmp.eq.s32.totalorder %s23, 0
      %p168 = por %p166, %p167
      %p169 = scmp.ne.s32.totalorder %s158, %s161
      %p170 = scmp.eq.s32.totalorder %s28, 1
      %p171 = por %p169, %p170
      %p172 = scmp.ne.s32.totalorder %s161, %s162
      %p173 = scmp.eq.s32.totalorder %s28, 0
      %p174 = por %p172, %p173
      %p175 = scmp.ne.s32.totalorder %s161, %s162
      %p176 = scmp.eq.s32.totalorder %s29, 1
      %p177 = por %p175, %p176
      %p179 = scmp.ne.s32.totalorder %s162, %s178
      %p180 = scmp.eq.s32.totalorder %s29, 0
      %p181 = por %p179, %p180
      %s182 = ssub.s32 %s23, %s30
      %p183 = scmp.eq.s32.totalorder %s182, 0
      %s185 = sadd.s32 %s184, 1
      %s186 = scalar_select %p183, %s184, %s185
      %p189 = pneg %p183
      %p190 = scmp.eq.s32.totalorder %s23, 1
      %p191 = por %p189, %p190
      %p192 = scmp.ne.s32.totalorder %s184, %s187
      %p193 = scmp.eq.s32.totalorder %s23, 0
      %p194 = por %p192, %p193
      %p195 = scmp.ne.s32.totalorder %s184, %s187
      %p196 = scmp.eq.s32.totalorder %s28, 1
      %p197 = por %p195, %p196
      %p198 = scmp.ne.s32.totalorder %s187, %s188
      %p199 = scmp.eq.s32.totalorder %s28, 0
      %p200 = por %p198, %p199
      %p201 = scmp.ne.s32.totalorder %s187, %s188
      %p202 = scmp.eq.s32.totalorder %s29, 1
      %p203 = por %p201, %p202
      %p205 = scmp.ne.s32.totalorder %s188, %s204
      %p206 = scmp.eq.s32.totalorder %s29, 0
      %p207 = por %p205, %p206
      %s209 = sadd.s32 %s208, 1
      %p212 = scmp.eq.s32.totalorder %s23, 1
      %p213 = scmp.ne.s32.totalorder %s208, %s210
      %p214 = scmp.eq.s32.totalorder %s23, 0
      %p215 = por %p213, %p214
      %p216 = scmp.ne.s32.totalorder %s208, %s210
      %p217 = scmp.eq.s32.totalorder %s28, 1
      %p218 = por %p216, %p217
      %p219 = scmp.ne.s32.totalorder %s210, %s211
      %p220 = scmp.eq.s32.totalorder %s28, 0
      %p221 = por %p219, %p220
      %p222 = scmp.ne.s32.totalorder %s210, %s211
      %p223 = scmp.eq.s32.totalorder %s29, 1
      %p224 = por %p222, %p223
      %p226 = scmp.ne.s32.totalorder %s211, %s225
      %p227 = scmp.eq.s32.totalorder %s29, 0
      %p228 = por %p226, %p227
      %p229 = scmp.le.s32.totalorder 1, %s23
      %p230 = scmp.lt.s32.totalorder %s23, 3
      %p231 = pnand %p229, %p230
      %p232 = pneg %p231
      // Predicated region
      $region9: #{decoder_forward.2} parent=5 // pred_check
        _
      $region10: #{decoder_forward.2} parent=5 // pred_check_branch
        %234 = sbr.rel (%p231) target = $region12
      $region11: #{decoder_forward.2} parent=5 // pred_region
        %s235 = ssub.s32 %s23, 1
        // Predicated region
        $region13: #{decoder_forward.2} parent=11 // pred_check
          %p236 = pneg %p44
        $region14: #{decoder_forward.2} parent=11 // pred_check_branch
          %238 = sbr.rel (%p236) target = $region16
        $region15: #{decoder_forward.2} parent=11 // pred_region
          _
        $region16: #{decoder_forward.2} parent=11 // pred_fallthru
          _
      $region12: #{decoder_forward.2} parent=5 // pred_fallthru
        _
      %p239 = scmp.lt.s32.totalorder %s23, 2
      // Predicated region
      $region17: #{decoder_forward.2} parent=5 // pred_check
        %p240 = pneg %p239
      $region18: #{decoder_forward.2} parent=5 // pred_check_branch
        %242 = sbr.rel (%p240) target = $region20
      $region19: #{decoder_forward.2} parent=5 // pred_region
        // Predicated region
        $region21: #{decoder_forward.2} parent=19 // pred_check
          %p243 = pneg %p64
        $region22: #{decoder_forward.2} parent=19 // pred_check_branch
          %245 = sbr.rel (%p243) target = $region24
        $region23: #{decoder_forward.2} parent=19 // pred_region
          %p246 = scmp.lt.s32.totalorder %s23, 1
          %s247 = scalar_select %p246, %s23, 1
          %s248 = smul.addr %s247, 8
          %s249 = scalar_lea.vmem %s1, %s248
        $region24: #{decoder_forward.2} parent=19 // pred_fallthru
          _
        // Predicated region
        $region25: #{decoder_forward.2} parent=19 // pred_check
          %p250 = pneg %p90
        $region26: #{decoder_forward.2} parent=19 // pred_check_branch
          %252 = sbr.rel (%p250) target = $region28
        $region27: #{decoder_forward.2} parent=19 // pred_region
          %s253 = sand.u32 %s80, 1
          %s254 = scalar_lea.sflag [#allocation4], %s253
          %s255 = sand.u32 %s80, 1
          %s256 = smul.addr %s255, 192
          %s257 = scalar_lea.vmem [#allocation3], %s256
          %s259 = ssub.s32 3072, 3072
          %260 = vsyncadd %s254, %s259
          %s261 = smul.addr %s23, 48
          %s262 = smul.addr %s261, 64
          %s263 = scalar_lea.hbm %s2, %s262
          %s264 = sshll.u32 %s257, 4
          %s265 = int_to_ptr.vmem [resolvable:$true] %s264
          %270 = dma.hbm_to_vmem [thread:$0]  %s263, 3072, %s265, %s254, 192, 192, 12
        $region28: #{decoder_forward.2} parent=19 // pred_fallthru
          _
        // Predicated region
        $region29: #{decoder_forward.2} parent=19 // pred_check
          %p271 = pneg %p116
        $region30: #{decoder_forward.2} parent=19 // pred_check_branch
          %273 = sbr.rel (%p271) target = $region32
        $region31: #{decoder_forward.2} parent=19 // pred_region
          %s274 = sand.u32 %s106, 1
          %s275 = scalar_lea.sflag [#allocation7], %s274
          %s276 = sand.u32 %s106, 1
          %s277 = smul.addr %s276, 192
          %s278 = scalar_lea.vmem [#allocation6], %s277
          %s280 = ssub.s32 3072, 3072
          %281 = vsyncadd %s275, %s280
          %s282 = smul.addr %s23, 48
          %s283 = smul.addr %s282, 64
          %s284 = scalar_lea.hbm %s3, %s283
          %s285 = sshll.u32 %s278, 4
          %s286 = int_to_ptr.vmem [resolvable:$true] %s285
          %291 = dma.hbm_to_vmem [thread:$0]  %s284, 3072, %s286, %s275, 192, 192, 12
        $region32: #{decoder_forward.2} parent=19 // pred_fallthru
          _
        // Predicated region
        $region33: #{decoder_forward.2} parent=19 // pred_check
          %p292 = pneg %p142
        $region34: #{decoder_forward.2} parent=19 // pred_check_branch
          %294 = sbr.rel (%p292) target = $region36
        $region35: #{decoder_forward.2} parent=19 // pred_region
          %p295 = scmp.lt.s32.totalorder %s23, 1
          %s296 = scalar_select %p295, %s23, 1
          %s297 = smul.addr %s296, 3
          %s298 = scalar_lea.vmem %s4, %s297
        $region36: #{decoder_forward.2} parent=19 // pred_fallthru
          _
        // Predicated region
        $region37: #{decoder_forward.2} parent=19 // pred_check
          %p299 = pneg %p168
        $region38: #{decoder_forward.2} parent=19 // pred_check_branch
          %301 = sbr.rel (%p299) target = $region40
        $region39: #{decoder_forward.2} parent=19 // pred_region
          %p302 = scmp.lt.s32.totalorder %s23, 1
          %s303 = scalar_select %p302, %s23, 1
          %s304 = smul.addr %s303, 3
          %s305 = scalar_lea.vmem %s5, %s304
        $region40: #{decoder_forward.2} parent=19 // pred_fallthru
          _
      $region20: #{decoder_forward.2} parent=5 // pred_fallthru
        _
      %p306 = scmp.le.s32.totalorder 1, %s23
      %p307 = scmp.lt.s32.totalorder %s23, 3
      %p308 = pnand %p306, %p307
      %p309 = pneg %p308
      // Predicated region
      $region41: #{decoder_forward.2} parent=5 // pred_check
        _
      $region42: #{decoder_forward.2} parent=5 // pred_check_branch
        %311 = sbr.rel (%p308) target = $region44
      $region43: #{decoder_forward.2} parent=5 // pred_region
        %s312 = ssub.s32 %s23, 1
        %s313 = sand.u32 %s83, 1
        %s314 = scalar_lea.sflag [#allocation4], %s313
        %s315 = sand.u32 %s83, 1
        %s316 = smul.addr %s315, 192
        %s317 = scalar_lea.vmem [#allocation3], %s316
        // Predicated region
        $region45: #{decoder_forward.2} parent=43 // pred_check
          %p318 = pneg %p96
        $region46: #{decoder_forward.2} parent=43 // pred_check_branch
          %320 = sbr.rel (%p318) target = $region48
        $region47: #{decoder_forward.2} parent=43 // pred_region
          %321 = dma.done %s314, 3072
        $region48: #{decoder_forward.2} parent=43 // pred_fallthru
          _
        %s322 = sand.u32 %s109, 1
        %s323 = scalar_lea.sflag [#allocation7], %s322
        %s324 = sand.u32 %s109, 1
        %s325 = smul.addr %s324, 192
        %s326 = scalar_lea.vmem [#allocation6], %s325
        // Predicated region
        $region49: #{decoder_forward.2} parent=43 // pred_check
          %p327 = pneg %p122
        $region50: #{decoder_forward.2} parent=43 // pred_check_branch
          %329 = sbr.rel (%p327) target = $region52
        $region51: #{decoder_forward.2} parent=43 // pred_region
          %330 = dma.done %s323, 3072
        $region52: #{decoder_forward.2} parent=43 // pred_fallthru
          _
        %p331 = pneg %p44
        %p332 = pneg %p41
        %p333 = scmp.lt.s32.totalorder %s28, 1
        %s334 = scalar_select %p333, %s28, 1
        %s335 = smul.addr %s334, 8
        %s336 = scalar_lea.vmem %s1, %s335
        %p337 = pneg %p70
        %p338 = pneg %p67
        %s339 = sand.u32 %s83, 1
        %s340 = scalar_lea.sflag [#allocation4], %s339
        %s341 = sand.u32 %s83, 1
        %s342 = smul.addr %s341, 192
        %s343 = scalar_lea.vmem [#allocation3], %s342
        %p344 = pneg %p96
        %p345 = pneg %p93
        %s346 = sand.u32 %s109, 1
        %s347 = scalar_lea.sflag [#allocation7], %s346
        %s348 = sand.u32 %s109, 1
        %s349 = smul.addr %s348, 192
        %s350 = scalar_lea.vmem [#allocation6], %s349
        %p351 = pneg %p122
        %p352 = pneg %p119
        %p353 = scmp.lt.s32.totalorder %s28, 1
        %s354 = scalar_select %p353, %s28, 1
        %s355 = smul.addr %s354, 3
        %s356 = scalar_lea.vmem %s4, %s355
        %p357 = pneg %p148
        %p358 = pneg %p145
        %p359 = scmp.lt.s32.totalorder %s28, 1
        %s360 = scalar_select %p359, %s28, 1
        %s361 = smul.addr %s360, 3
        %s362 = scalar_lea.vmem %s5, %s361
        %p363 = pneg %p174
        %p364 = pneg %p171
        %p365 = pneg %p200
        %p366 = pneg %p197
        %s367 = sand.u32 %s187, 1
        %s368 = scalar_lea.sflag [#allocation5], %s367
        %s369 = sand.u32 %s187, 1
        %s370 = smul.addr %s369, 8
        %s371 = scalar_lea.vmem [#allocation8], %s370
        %p372 = pneg %p221
        %p373 = pneg %p218
        %p374 = scmp.lt.s32.totalorder %s28, 1
        %s375 = scalar_select %p374, %s28, 1
        %s376 = smul.addr %s375, 8
        %s377 = scalar_lea.vmem %s1, %s376
        %p378 = scmp.lt.s32.totalorder %s28, 1
        %s379 = scalar_select %p378, %s28, 1
        %s380 = smul.addr %s379, 3
        %s381 = scalar_lea.vmem %s4, %s380
        %p382 = scmp.lt.s32.totalorder %s28, 1
        %s383 = scalar_select %p382, %s28, 1
        %s384 = smul.addr %s383, 3
        %s385 = scalar_lea.vmem %s5, %s384
        %p387 = scmp.eq.s32.totalorder %s28, 0
        // Predicated region
        $region53: #{decoder_forward.2} parent=43 // pred_check
          %p388 = pneg %p387
        $region54: #{decoder_forward.2} parent=43 // pred_check_branch
          %390 = sbr.rel (%p388) target = $region56
        $region55: #{decoder_forward.2} parent=43 // pred_region
          %v391 = vld [vmem:[%s0] sm:$0xf]
          %392 = vst [vmem:[#allocation2] sm:$0xf] %v391
        $region56: #{decoder_forward.2} parent=43 // pred_fallthru
          _
        %v393 = vld [vmem:[#allocation2] sm:$0xf]
        %v394 = vld [vmem:[%s377] sm:$0xff]
        %v395 = vld [vmem:[%s317] sm:$0xff]
        %v396 = vld [vmem:[%s317 + $0x8] sm:$0xf]
        %v397 = vld [vmem:[%s317 + $0xc] sm:$0xff]
        %v398 = vld [vmem:[%s317 + $0x14] sm:$0xf]
        %v399 = vld [vmem:[%s317 + $0x18] sm:$0xff]
        %v400 = vld [vmem:[%s317 + $0x20] sm:$0xf]
        %v401 = vld [vmem:[%s317 + $0x24] sm:$0xff]
        %v402 = vld [vmem:[%s317 + $0x2c] sm:$0xf]
        %v403 = vld [vmem:[%s317 + $0x30] sm:$0xff]
        %v404 = vld [vmem:[%s317 + $0x38] sm:$0xf]
        %v405 = vld [vmem:[%s317 + $0x3c] sm:$0xff]
        %v406 = vld [vmem:[%s317 + $0x44] sm:$0xf]
        %v407 = vld [vmem:[%s317 + $0x48] sm:$0xff]
        %v408 = vld [vmem:[%s317 + $0x50] sm:$0xf]
        %v409 = vld [vmem:[%s317 + $0x54] sm:$0xff]
        %v410 = vld [vmem:[%s317 + $0x5c] sm:$0xf]
        %v411 = vld [vmem:[%s317 + $0x60] sm:$0xff]
        %v412 = vld [vmem:[%s317 + $0x68] sm:$0xf]
        %v413 = vld [vmem:[%s317 + $0x6c] sm:$0xff]
        %v414 = vld [vmem:[%s317 + $0x74] sm:$0xf]
        %v415 = vld [vmem:[%s317 + $0x78] sm:$0xff]
        %v416 = vld [vmem:[%s317 + $0x80] sm:$0xf]
        %v417 = vld [vmem:[%s317 + $0x84] sm:$0xff]
        %v418 = vld [vmem:[%s317 + $0x8c] sm:$0xf]
        %v419 = vld [vmem:[%s317 + $0x90] sm:$0xff]
        %v420 = vld [vmem:[%s317 + $0x98] sm:$0xf]
        %v421 = vld [vmem:[%s317 + $0x9c] sm:$0xff]
        %v422 = vld [vmem:[%s317 + $0xa4] sm:$0xf]
        %v423 = vld [vmem:[%s317 + $0xa8] sm:$0xff]
        %v424 = vld [vmem:[%s317 + $0xb0] sm:$0xf]
        %v425 = vld [vmem:[%s317 + $0xb4] sm:$0xff]
        %v426 = vld [vmem:[%s317 + $0xbc] sm:$0xf]
        %v427 = vld [vmem:[%s381] sm:$0x7]
        %v429 = vlaneseq
        %v430 = vshrl.u32 %v429, 7
        %v431 = vsub.s32 0, %v430
        %v432 = vrot.slane %v427, %v431
        %v433 = vlaneseq
        %v434 = vshrl.u32 %v433, 7
        %v435 = vsub.s32 1, %v434
        %v436 = vrot.slane %v427, %v435
        %v437 = vlaneseq
        %v438 = vshrl.u32 %v437, 7
        %v439 = vsub.s32 2, %v438
        %v440 = vrot.slane %v427, %v439
        %v476 = vunpack.c.l.b16 %v395
        %v477 = vunpack.c.h.b16 %v395
        %v478 = vunpack.c.l.b16 %v396
        %v479 = vunpack.c.l.b16 %v397
        %v480 = vunpack.c.h.b16 %v397
        %v481 = vunpack.c.l.b16 %v398
        %v482 = vunpack.c.l.b16 %v399
        %v483 = vunpack.c.h.b16 %v399
        %v484 = vunpack.c.l.b16 %v400
        %v485 = vunpack.c.l.b16 %v401
        %v486 = vunpack.c.h.b16 %v401
        %v487 = vunpack.c.l.b16 %v402
        %v488 = vunpack.c.l.b16 %v403
        %v489 = vunpack.c.h.b16 %v403
        %v490 = vunpack.c.l.b16 %v404
        %v491 = vunpack.c.l.b16 %v405
        %v492 = vunpack.c.h.b16 %v405
        %v493 = vunpack.c.l.b16 %v406
        %v494 = vunpack.c.l.b16 %v407
        %v495 = vunpack.c.h.b16 %v407
        %v496 = vunpack.c.l.b16 %v408
        %v497 = vunpack.c.l.b16 %v409
        %v498 = vunpack.c.h.b16 %v409
        %v499 = vunpack.c.l.b16 %v410
        %v500 = vunpack.c.l.b16 %v411
        %v501 = vunpack.c.h.b16 %v411
        %v502 = vunpack.c.l.b16 %v412
        %v503 = vunpack.c.l.b16 %v413
        %v504 = vunpack.c.h.b16 %v413
        %v505 = vunpack.c.l.b16 %v414
        %v506 = vunpack.c.l.b16 %v415
        %v507 = vunpack.c.h.b16 %v415
        %v508 = vunpack.c.l.b16 %v416
        %v509 = vunpack.c.l.b16 %v417
        %v510 = vunpack.c.h.b16 %v417
        %v511 = vunpack.c.l.b16 %v418
        %v512 = vunpack.c.l.b16 %v419
        %v513 = vunpack.c.h.b16 %v419
        %v514 = vunpack.c.l.b16 %v420
        %v515 = vunpack.c.l.b16 %v421
        %v516 = vunpack.c.h.b16 %v421
        %v517 = vunpack.c.l.b16 %v422
        %v518 = vunpack.c.l.b16 %v423
        %v519 = vunpack.c.h.b16 %v423
        %v520 = vunpack.c.l.b16 %v424
        %v521 = vunpack.c.l.b16 %v425
        %v522 = vunpack.c.h.b16 %v425
        %v523 = vunpack.c.l.b16 %v426
        %v524 = vpack.c.b16 %v479, %v476
        %v525 = vpack.c.b16 %v480, %v477
        %v526 = vpack.c.b16 %v481, %v478
        %v527 = vpack.c.b16 %v485, %v482
        %v528 = vpack.c.b16 %v486, %v483
        %v529 = vpack.c.b16 %v487, %v484
        %v530 = vpack.c.b16 %v491, %v488
        %v531 = vpack.c.b16 %v492, %v489
        %v532 = vpack.c.b16 %v493, %v490
        %v533 = vpack.c.b16 %v497, %v494
        %v534 = vpack.c.b16 %v498, %v495
        %v535 = vpack.c.b16 %v499, %v496
        %v536 = vpack.c.b16 %v503, %v500
        %v537 = vpack.c.b16 %v504, %v501
        %v538 = vpack.c.b16 %v505, %v502
        %v539 = vpack.c.b16 %v509, %v506
        %v540 = vpack.c.b16 %v510, %v507
        %v541 = vpack.c.b16 %v511, %v508
        %v542 = vpack.c.b16 %v515, %v512
        %v543 = vpack.c.b16 %v516, %v513
        %v544 = vpack.c.b16 %v517, %v514
        %v545 = vpack.c.b16 %v521, %v518
        %v546 = vpack.c.b16 %v522, %v519
        %v547 = vpack.c.b16 %v523, %v520
        %572 = vmatprep.subr.bf16.mxu0 %v525
        %573 = vmatpush1.bf16.msra.mxu0 %v524
        %574 = vmatprep.subr.bf16.mxu0 %v528
        %575 = vmatpush1.bf16.msra.mxu0 %v527
        %576 = vmatprep.subr.bf16.mxu0 %v531
        %577 = vmatpush1.bf16.msra.mxu0 %v530
        %578 = vmatprep.subr.bf16.mxu0 %v534
        %579 = vmatpush1.bf16.msra.mxu0 %v533
        %580 = vmatprep.subr.bf16.mxu0 %v537
        %581 = vmatpush1.bf16.msra.mxu0 %v536
        %582 = vmatprep.subr.bf16.mxu0 %v540
        %583 = vmatpush1.bf16.msra.mxu0 %v539
        %584 = vmatprep.subr.bf16.mxu0 %v543
        %585 = vmatpush1.bf16.msra.mxu0 %v542
        %586 = vmatprep.subr.bf16.mxu0 %v546
        %587 = vmatpush1.bf16.msra.mxu0 %v545
        %588 = vmatprep.subr.bf16.mxu0 0
        %589 = vmatpush1.bf16.msra.mxu0 0
        %590 = vmatprep.subr.bf16.mxu0 0
        %591 = vmatpush1.bf16.msra.mxu0 0
        %592 = vmatprep.subr.bf16.mxu0 0
        %593 = vmatpush1.bf16.msra.mxu0 0
        %594 = vmatprep.subr.bf16.mxu0 0
        %595 = vmatpush1.bf16.msra.mxu0 0
        %596 = vmatprep.subr.bf16.mxu0 0
        %597 = vmatpush1.bf16.msra.mxu0 0
        %598 = vmatprep.subr.bf16.mxu0 0
        %599 = vmatpush1.bf16.msra.mxu0 0
        %600 = vmatprep.subr.bf16.mxu0 0
        %601 = vmatpush1.bf16.msra.mxu0 0
        %602 = vmatprep.subr.bf16.mxu0 0
        %603 = vmatpush1.bf16.msra.mxu0 0
        %604 = vmatprep.mubr.bf16.mxu0 0
        %605 = vmatmul.mubr.bf16.gmra.mrb[0].mxu0 %v393
        %v606 = vpop.f32.mrb[0].mxu0
        %v607 = vadd.f32 %v432, %v606
        %v608 = vpop.f32.mrb[0].mxu0
        %v609 = vadd.f32 %v436, %v608
        %v610 = vpop.f32.mrb[0].mxu0
        %v611 = vpop.f32.mrb[0].mxu0
        %612 = vdwg.mxu0
        %613 = vmatprep.subr.bf16.mxu0 0
        %614 = vmatpush1.bf16.msra.mxu0 %v526
        %615 = vmatprep.subr.bf16.mxu0 0
        %616 = vmatpush1.bf16.msra.mxu0 %v529
        %617 = vmatprep.subr.bf16.mxu0 0
        %618 = vmatpush1.bf16.msra.mxu0 %v532
        %619 = vmatprep.subr.bf16.mxu0 0
        %620 = vmatpush1.bf16.msra.mxu0 %v535
        %621 = vmatprep.subr.bf16.mxu0 0
        %622 = vmatpush1.bf16.msra.mxu0 %v538
        %623 = vmatprep.subr.bf16.mxu0 0
        %624 = vmatpush1.bf16.msra.mxu0 %v541
        %625 = vmatprep.subr.bf16.mxu0 0
        %626 = vmatpush1.bf16.msra.mxu0 %v544
        %627 = vmatprep.subr.bf16.mxu0 0
        %628 = vmatpush1.bf16.msra.mxu0 %v547
        %629 = vmatprep.subr.bf16.mxu0 0
        %630 = vmatpush1.bf16.msra.mxu0 0
        %631 = vmatprep.subr.bf16.mxu0 0
        %632 = vmatpush1.bf16.msra.mxu0 0
        %633 = vmatprep.subr.bf16.mxu0 0
        %634 = vmatpush1.bf16.msra.mxu0 0
        %635 = vmatprep.subr.bf16.mxu0 0
        %636 = vmatpush1.bf16.msra.mxu0 0
        %637 = vmatprep.subr.bf16.mxu0 0
        %638 = vmatpush1.bf16.msra.mxu0 0
        %639 = vmatprep.subr.bf16.mxu0 0
        %640 = vmatpush1.bf16.msra.mxu0 0
        %641 = vmatprep.subr.bf16.mxu0 0
        %642 = vmatpush1.bf16.msra.mxu0 0
        %643 = vmatprep.subr.bf16.mxu0 0
        %644 = vmatpush1.bf16.msra.mxu0 0
        %645 = vmatprep.mubr.bf16.mxu0 0
        %646 = vmatmul.mubr.bf16.gmra.mrb[0].mxu0 %v393
        %v647 = vpop.f32.mrb[0].mxu0
        %v648 = vadd.f32 %v440, %v647
        %v649 = vpop.f32.mrb[0].mxu0
        %v650 = vpop.f32.mrb[0].mxu0
        %v651 = vpop.f32.mrb[0].mxu0
        %652 = vdwg.mxu0
        %v653 = vpack.c.bf16 %v394, %v394
        %v654 = vld [vmem:[%s326] sm:$0xff]
        %v655 = vld [vmem:[%s326 + $0x8] sm:$0xf]
        %v656 = vld [vmem:[%s326 + $0xc] sm:$0xff]
        %v657 = vld [vmem:[%s326 + $0x14] sm:$0xf]
        %v658 = vld [vmem:[%s326 + $0x18] sm:$0xff]
        %v659 = vld [vmem:[%s326 + $0x20] sm:$0xf]
        %v660 = vld [vmem:[%s326 + $0x24] sm:$0xff]
        %v661 = vld [vmem:[%s326 + $0x2c] sm:$0xf]
        %v662 = vld [vmem:[%s326 + $0x30] sm:$0xff]
        %v663 = vld [vmem:[%s326 + $0x38] sm:$0xf]
        %v664 = vld [vmem:[%s326 + $0x3c] sm:$0xff]
        %v665 = vld [vmem:[%s326 + $0x44] sm:$0xf]
        %v666 = vld [vmem:[%s326 + $0x48] sm:$0xff]
        %v667 = vld [vmem:[%s326 + $0x50] sm:$0xf]
        %v668 = vld [vmem:[%s326 + $0x54] sm:$0xff]
        %v669 = vld [vmem:[%s326 + $0x5c] sm:$0xf]
        %v670 = vld [vmem:[%s326 + $0x60] sm:$0xff]
        %v671 = vld [vmem:[%s326 + $0x68] sm:$0xf]
        %v672 = vld [vmem:[%s326 + $0x6c] sm:$0xff]
        %v673 = vld [vmem:[%s326 + $0x74] sm:$0xf]
        %v674 = vld [vmem:[%s326 + $0x78] sm:$0xff]
        %v675 = vld [vmem:[%s326 + $0x80] sm:$0xf]
        %v676 = vld [vmem:[%s326 + $0x84] sm:$0xff]
        %v677 = vld [vmem:[%s326 + $0x8c] sm:$0xf]
        %v678 = vld [vmem:[%s326 + $0x90] sm:$0xff]
        %v679 = vld [vmem:[%s326 + $0x98] sm:$0xf]
        %v680 = vld [vmem:[%s326 + $0x9c] sm:$0xff]
        %v681 = vld [vmem:[%s326 + $0xa4] sm:$0xf]
        %v682 = vld [vmem:[%s326 + $0xa8] sm:$0xff]
        %v683 = vld [vmem:[%s326 + $0xb0] sm:$0xf]
        %v684 = vld [vmem:[%s326 + $0xb4] sm:$0xff]
        %v685 = vld [vmem:[%s326 + $0xbc] sm:$0xf]
        %v686 = vld [vmem:[%s385] sm:$0x7]
        %v688 = vlaneseq
        %v689 = vshrl.u32 %v688, 7
        %v690 = vsub.s32 0, %v689
        %v691 = vrot.slane %v686, %v690
        %v692 = vlaneseq
        %v693 = vshrl.u32 %v692, 7
        %v694 = vsub.s32 1, %v693
        %v695 = vrot.slane %v686, %v694
        %v696 = vlaneseq
        %v697 = vshrl.u32 %v696, 7
        %v698 = vsub.s32 2, %v697
        %v699 = vrot.slane %v686, %v698
        %v735 = vunpack.c.l.b16 %v654
        %v736 = vunpack.c.h.b16 %v654
        %v737 = vunpack.c.l.b16 %v655
        %v738 = vunpack.c.l.b16 %v656
        %v739 = vunpack.c.h.b16 %v656
        %v740 = vunpack.c.l.b16 %v657
        %v741 = vunpack.c.l.b16 %v658
        %v742 = vunpack.c.h.b16 %v658
        %v743 = vunpack.c.l.b16 %v659
        %v744 = vunpack.c.l.b16 %v660
        %v745 = vunpack.c.h.b16 %v660
        %v746 = vunpack.c.l.b16 %v661
        %v747 = vunpack.c.l.b16 %v662
        %v748 = vunpack.c.h.b16 %v662
        %v749 = vunpack.c.l.b16 %v663
        %v750 = vunpack.c.l.b16 %v664
        %v751 = vunpack.c.h.b16 %v664
        %v752 = vunpack.c.l.b16 %v665
        %v753 = vunpack.c.l.b16 %v666
        %v754 = vunpack.c.h.b16 %v666
        %v755 = vunpack.c.l.b16 %v667
        %v756 = vunpack.c.l.b16 %v668
        %v757 = vunpack.c.h.b16 %v668
        %v758 = vunpack.c.l.b16 %v669
        %v759 = vunpack.c.l.b16 %v670
        %v760 = vunpack.c.h.b16 %v670
        %v761 = vunpack.c.l.b16 %v671
        %v762 = vunpack.c.l.b16 %v672
        %v763 = vunpack.c.h.b16 %v672
        %v764 = vunpack.c.l.b16 %v673
        %v765 = vunpack.c.l.b16 %v674
        %v766 = vunpack.c.h.b16 %v674
        %v767 = vunpack.c.l.b16 %v675
        %v768 = vunpack.c.l.b16 %v676
        %v769 = vunpack.c.h.b16 %v676
        %v770 = vunpack.c.l.b16 %v677
        %v771 = vunpack.c.l.b16 %v678
        %v772 = vunpack.c.h.b16 %v678
        %v773 = vunpack.c.l.b16 %v679
        %v774 = vunpack.c.l.b16 %v680
        %v775 = vunpack.c.h.b16 %v680
        %v776 = vunpack.c.l.b16 %v681
        %v777 = vunpack.c.l.b16 %v682
        %v778 = vunpack.c.h.b16 %v682
        %v779 = vunpack.c.l.b16 %v683
        %v780 = vunpack.c.l.b16 %v684
        %v781 = vunpack.c.h.b16 %v684
        %v782 = vunpack.c.l.b16 %v685
        %v783 = vpack.c.b16 %v738, %v735
        %v784 = vpack.c.b16 %v739, %v736
        %v785 = vpack.c.b16 %v740, %v737
        %v786 = vpack.c.b16 %v744, %v741
        %v787 = vpack.c.b16 %v745, %v742
        %v788 = vpack.c.b16 %v746, %v743
        %v789 = vpack.c.b16 %v750, %v747
        %v790 = vpack.c.b16 %v751, %v748
        %v791 = vpack.c.b16 %v752, %v749
        %v792 = vpack.c.b16 %v756, %v753
        %v793 = vpack.c.b16 %v757, %v754
        %v794 = vpack.c.b16 %v758, %v755
        %v795 = vpack.c.b16 %v762, %v759
        %v796 = vpack.c.b16 %v763, %v760
        %v797 = vpack.c.b16 %v764, %v761
        %v798 = vpack.c.b16 %v768, %v765
        %v799 = vpack.c.b16 %v769, %v766
        %v800 = vpack.c.b16 %v770, %v767
        %v801 = vpack.c.b16 %v774, %v771
        %v802 = vpack.c.b16 %v775, %v772
        %v803 = vpack.c.b16 %v776, %v773
        %v804 = vpack.c.b16 %v780, %v777
        %v805 = vpack.c.b16 %v781, %v778
        %v806 = vpack.c.b16 %v782, %v779
        %831 = vmatprep.subr.bf16.mxu0 %v784
        %832 = vmatpush1.bf16.msra.mxu0 %v783
        %833 = vmatprep.subr.bf16.mxu0 %v787
        %834 = vmatpush1.bf16.msra.mxu0 %v786
        %835 = vmatprep.subr.bf16.mxu0 %v790
        %836 = vmatpush1.bf16.msra.mxu0 %v789
        %837 = vmatprep.subr.bf16.mxu0 %v793
        %838 = vmatpush1.bf16.msra.mxu0 %v792
        %839 = vmatprep.subr.bf16.mxu0 %v796
        %840 = vmatpush1.bf16.msra.mxu0 %v795
        %841 = vmatprep.subr.bf16.mxu0 %v799
        %842 = vmatpush1.bf16.msra.mxu0 %v798
        %843 = vmatprep.subr.bf16.mxu0 %v802
        %844 = vmatpush1.bf16.msra.mxu0 %v801
        %845 = vmatprep.subr.bf16.mxu0 %v805
        %846 = vmatpush1.bf16.msra.mxu0 %v804
        %847 = vmatprep.subr.bf16.mxu0 0
        %848 = vmatpush1.bf16.msra.mxu0 0
        %849 = vmatprep.subr.bf16.mxu0 0
        %850 = vmatpush1.bf16.msra.mxu0 0
        %851 = vmatprep.subr.bf16.mxu0 0
        %852 = vmatpush1.bf16.msra.mxu0 0
        %853 = vmatprep.subr.bf16.mxu0 0
        %854 = vmatpush1.bf16.msra.mxu0 0
        %855 = vmatprep.subr.bf16.mxu0 0
        %856 = vmatpush1.bf16.msra.mxu0 0
        %857 = vmatprep.subr.bf16.mxu0 0
        %858 = vmatpush1.bf16.msra.mxu0 0
        %859 = vmatprep.subr.bf16.mxu0 0
        %860 = vmatpush1.bf16.msra.mxu0 0
        %861 = vmatprep.subr.bf16.mxu0 0
        %862 = vmatpush1.bf16.msra.mxu0 0
        %863 = vmatprep.mubr.bf16.mxu0 0
        %864 = vmatmul.mubr.bf16.gmra.mrb[0].mxu0 %v653
        %v865 = vpop.f32.mrb[0].mxu0
        %v866 = vadd.f32 %v691, %v865
        %v867 = vpop.f32.mrb[0].mxu0
        %v868 = vadd.f32 %v695, %v867
        %v869 = vpop.f32.mrb[0].mxu0
        %v870 = vpop.f32.mrb[0].mxu0
        %871 = vdwg.mxu0
        %872 = vmatprep.subr.bf16.mxu0 0
        %873 = vmatpush1.bf16.msra.mxu0 %v785
        %874 = vmatprep.subr.bf16.mxu0 0
        %875 = vmatpush1.bf16.msra.mxu0 %v788
        %876 = vmatprep.subr.bf16.mxu0 0
        %877 = vmatpush1.bf16.msra.mxu0 %v791
        %878 = vmatprep.subr.bf16.mxu0 0
        %879 = vmatpush1.bf16.msra.mxu0 %v794
        %880 = vmatprep.subr.bf16.mxu0 0
        %881 = vmatpush1.bf16.msra.mxu0 %v797
        %882 = vmatprep.subr.bf16.mxu0 0
        %883 = vmatpush1.bf16.msra.mxu0 %v800
        %884 = vmatprep.subr.bf16.mxu0 0
        %885 = vmatpush1.bf16.msra.mxu0 %v803
        %886 = vmatprep.subr.bf16.mxu0 0
        %887 = vmatpush1.bf16.msra.mxu0 %v806
        %888 = vmatprep.subr.bf16.mxu0 0
        %889 = vmatpush1.bf16.msra.mxu0 0
        %890 = vmatprep.subr.bf16.mxu0 0
        %891 = vmatpush1.bf16.msra.mxu0 0
        %892 = vmatprep.subr.bf16.mxu0 0
        %893 = vmatpush1.bf16.msra.mxu0 0
        %894 = vmatprep.subr.bf16.mxu0 0
        %895 = vmatpush1.bf16.msra.mxu0 0
        %896 = vmatprep.subr.bf16.mxu0 0
        %897 = vmatpush1.bf16.msra.mxu0 0
        %898 = vmatprep.subr.bf16.mxu0 0
        %899 = vmatpush1.bf16.msra.mxu0 0
        %900 = vmatprep.subr.bf16.mxu0 0
        %901 = vmatpush1.bf16.msra.mxu0 0
        %902 = vmatprep.subr.bf16.mxu0 0
        %903 = vmatpush1.bf16.msra.mxu0 0
        %904 = vmatprep.mubr.bf16.mxu0 0
        %905 = vmatmul.mubr.bf16.gmra.mrb[0].mxu0 %v653
        %v906 = vpop.f32.mrb[0].mxu0
        %v907 = vadd.f32 %v699, %v906
        %v908 = vpop.f32.mrb[0].mxu0
        %v909 = vpop.f32.mrb[0].mxu0
        %v910 = vpop.f32.mrb[0].mxu0
        %911 = vdwg.mxu0
        %v912 = vadd.f32 %v607, %v866
        %v913 = vxor.u32 %v912, 2147483648
        %v914 = vmul.f32 %v913, 1.442695
        %v915 = vpow.pop %v914
        %v916 = vadd.f32 %v915, 1.0
        %v917 = vrcp.pop %v916
        %v918 = vmul.f32 1.0, %v917
        %v919 = vadd.f32 %v609, %v868
        %v920 = vxor.u32 %v919, 2147483648
        %v921 = vmul.f32 %v920, 1.442695
        %v922 = vpow.pop %v921
        %v923 = vadd.f32 %v922, 1.0
        %v924 = vrcp.pop %v923
        %v925 = vmul.f32 1.0, %v924
        %v926 = vmul.f32 %v918, %v907
        %v927 = vadd.f32 %v648, %v926
        %v928 = vtanh.pop %v927
        %v929 = vsub.f32 1.0, %v925
        %v930 = vmul.f32 %v929, %v928
        %v931 = vmul.f32 %v925, %v394
        %v932 = vadd.f32 %v930, %v931
        %933 = vst [vmem:[%s371] sm:$0xff] %v932
        %v934 = vpack.c.bf16 %v932, %v932
        %935 = vst [vmem:[#allocation2] sm:$0xf] %v934
        %p936 = scmp.eq.s32.totalorder %s28, 1
        // Predicated region
        $region57: #{decoder_forward.2} parent=43 // pred_check
          %p937 = pneg %p936
        $region58: #{decoder_forward.2} parent=43 // pred_check_branch
          %939 = sbr.rel (%p937) target = $region60
        $region59: #{decoder_forward.2} parent=43 // pred_region
          %940 = vst [vmem:[%s7] sm:$0xf] %v934
        $region60: #{decoder_forward.2} parent=43 // pred_fallthru
          _
        %s941 = sand.u32 %s187, 1
        %s942 = scalar_lea.sflag [#allocation5], %s941
        %s943 = sand.u32 %s187, 1
        %s944 = smul.addr %s943, 8
        %s945 = scalar_lea.vmem [#allocation8], %s944
        // Predicated region
        $region61: #{decoder_forward.2} parent=43 // pred_check
          %p946 = pneg %p197
        $region62: #{decoder_forward.2} parent=43 // pred_check_branch
          %948 = sbr.rel (%p946) target = $region64
        $region63: #{decoder_forward.2} parent=43 // pred_region
          %s950 = ssub.s32 128, 128
          %951 = vsyncadd %s942, %s950
          %s952 = smul.addr %s28, 128
          %s953 = scalar_lea.hbm %s6, %s952
          %s955 = sshll.u32 %s945, 4
          %s956 = int_to_ptr.vmem [resolvable:$true] %s955
          %958 = dma.vmem_to_hbm [thread:$0]  %s956, 128, %s953, %s942
        $region64: #{decoder_forward.2} parent=43 // pred_fallthru
          _
        // Predicated region
        $region65: #{decoder_forward.2} parent=43 // pred_check
          %p959 = pneg %p218
        $region66: #{decoder_forward.2} parent=43 // pred_check_branch
          %961 = sbr.rel (%p959) target = $region68
        $region67: #{decoder_forward.2} parent=43 // pred_region
          _
        $region68: #{decoder_forward.2} parent=43 // pred_fallthru
          _
        // Predicated region
        $region69: #{decoder_forward.2} parent=43 // pred_check
          %p962 = pneg %p218
        $region70: #{decoder_forward.2} parent=43 // pred_check_branch
          %964 = sbr.rel (%p962) target = $region72
        $region71: #{decoder_forward.2} parent=43 // pred_region
          _
        $region72: #{decoder_forward.2} parent=43 // pred_fallthru
          _
      $region44: #{decoder_forward.2} parent=5 // pred_fallthru
        _
      %p965 = scmp.le.s32.totalorder 2, %s23
      // Predicated region
      $region73: #{decoder_forward.2} parent=5 // pred_check
        %p966 = pneg %p965
      $region74: #{decoder_forward.2} parent=5 // pred_check_branch
        %968 = sbr.rel (%p966) target = $region76
      $region75: #{decoder_forward.2} parent=5 // pred_region
        %s969 = ssub.s32 %s23, 2
        // Predicated region
        $region77: #{decoder_forward.2} parent=75 // pred_check
          %p970 = pneg %p203
        $region78: #{decoder_forward.2} parent=75 // pred_check_branch
          %972 = sbr.rel (%p970) target = $region80
        $region79: #{decoder_forward.2} parent=75 // pred_region
          %s973 = sand.u32 %s188, 1
          %s974 = scalar_lea.sflag [#allocation5], %s973
          %s975 = sand.u32 %s188, 1
          %s976 = smul.addr %s975, 8
          %s977 = scalar_lea.vmem [#allocation8], %s976
          %978 = dma.done %s974, 128
        $region80: #{decoder_forward.2} parent=75 // pred_fallthru
          _
      $region76: #{decoder_forward.2} parent=5 // pred_fallthru
        _
    $region6: #{decoder_forward.2} parent=1 // loop_footer
      %s27 = sadd.s32 1, %s23
    $region7: #{decoder_forward.2} parent=1 // loop_footer_branch
      %22 = sbr.rel target = $region3
    $region8: #{decoder_forward.2} parent=1 // loop_exit
      _
    %979 = vsyncpa [#allocation4], 1
    %s980 = scalar_lea.sflag [#allocation4], 1
    %981 = vsyncpa %s980, 1
    %982 = vsyncpa [#allocation7], 1
    %s983 = scalar_lea.sflag [#allocation7], 1
    %984 = vsyncpa %s983, 1
    %985 = vsyncpa [#allocation5], 1
    %s986 = scalar_lea.sflag [#allocation5], 1
    %987 = vsyncpa %s986, 1

</llo_original>
